<compile_context>
chip_gen: v7x
topology: tpu7x:2x2x1
jax: 0.10.0
libtpu: 0.0.40
codegen_flags: <defaults>
</compile_context>

<pallas_src>
import jax
import jax.numpy as jnp
import numpy as np
from jax import lax
from jax.experimental import pallas as pl
from jax.experimental.pallas import tpu as pltpu

EPS = 1e-5


# ---------------------------------------------------------------------------
# In-kernel helpers
# ---------------------------------------------------------------------------
def _im2col_conv_stats_store(p_ref, patches_ref, w_ref, z_ref, stats_ref):
    """3x3 'same' conv of p_ref (H, W, C) with flattened weights w_ref (9*C, Cout).

    One MXU matmul via an im2col patch buffer, one-pass sum / sum-of-squares partial
    BN statistics, and a lane-dense (H, W*Cout) store of the raw (pre-BN) output.
    """
    H, W, C = p_ref.shape
    Cout = w_ref.shape[1]

    # Zero the patch buffer once (provides the zero halo of padding=1), then copy the
    # 9 shifted valid rectangles.  All slices are static; no padded activation scratch.
    patches_ref[...] = jnp.zeros(patches_ref.shape, patches_ref.dtype)
    k = 0
    for dh in (-1, 0, 1):
        sh0, sh1 = max(0, dh), H + min(0, dh)
        for dw in (-1, 0, 1):
            sw0, sw1 = max(0, dw), W + min(0, dw)
            patches_ref[sh0 - dh:sh1 - dh, sw0 - dw:sw1 - dw, k * C:(k + 1) * C] = \
                p_ref[sh0:sh1, sw0:sw1, :]
            k += 1

    # Single matmul: (H*W, 9*C) x (9*C, Cout) -> (H*W, Cout), f32 accumulation on the MXU.
    patches = patches_ref[...].reshape(H * W, 9 * C)
    z = jnp.dot(patches, w_ref[...], preferred_element_type=jnp.float32)

    # Per-tile partial BN statistics (single pass: sum and sum of squares).
    s = jnp.sum(z, axis=0, keepdims=True)          # (1, Cout)
    sq = jnp.sum(z * z, axis=0, keepdims=True)     # (1, Cout)
    stats_ref[0] = jnp.concatenate([s, sq], axis=0)

    # Lane-dense store: (H*W, Cout) -> (H, W*Cout).
    z3 = z.reshape(H, W, Cout)
    z_ref[0] = jnp.concatenate([z3[:, w, :] for w in range(W)], axis=1)


def pool_conv1_kernel(x_ref, w_ref, z_ref, stats_ref, p_ref, patches_ref):
    """MaxPool2d(2) + conv1 (raw) + partial BN stats for one batch sample."""
    H, W, Cin = p_ref.shape
    # x_ref block: (1, 2, 2, H, W*Cin) -- pooling parity pre-split by the wrapper,
    # so the 2x2 max pool is three purely element-wise maxes (no strided slices).
    pooled = jnp.maximum(jnp.maximum(x_ref[0, 0, 0], x_ref[0, 0, 1]),
                         jnp.maximum(x_ref[0, 1, 0], x_ref[0, 1, 1]))   # (H, W*Cin)
    # Un-merge the lane dim into (W, Cin) once, into a small scratch used by im2col.
    for w in range(W):
        p_ref[:, w, :] = pooled[:, w * Cin:(w + 1) * Cin]
    _im2col_conv_stats_store(p_ref, patches_ref, w_ref, z_ref, stats_ref)


def conv2_kernel(z1_ref, sc_ref, sh_ref, w_ref, z_ref, stats_ref, p_ref, patches_ref):
    """Folded BN1 + ReLU (single FMA) + conv2 (raw) + partial BN stats for one sample."""
    H, W, C = p_ref.shape
    # BN1 + ReLU applied in the lane-dense (H, W*C) layout with pre-tiled scale/shift.
    a = jnp.maximum(z1_ref[0] * sc_ref[...] + sh_ref[...], 0.0)         # (H, W*C)
    for w in range(W):
        p_ref[:, w, :] = a[:, w * C:(w + 1) * C]
    _im2col_conv_stats_store(p_ref, patches_ref, w_ref, z_ref, stats_ref)


def bn_relu_kernel(z_ref, sc_ref, sh_ref, o_ref):
    """Folded BN2 + ReLU, fully lane-dense element-wise pass."""
    o_ref[0] = jnp.maximum(z_ref[0] * sc_ref[...] + sh_ref[...], 0.0)


# ---------------------------------------------------------------------------
# Wrapper
# ---------------------------------------------------------------------------
def _bn_scale_shift(stats, gamma, beta, count, width):
    """Reduce per-tile (sum, sumsq) -> folded BN scale/shift, tiled to (1, width*C)."""
    s = jnp.sum(stats[:, 0, :], axis=0)
    sq = jnp.sum(stats[:, 1, :], axis=0)
    mean = s / count
    var = jnp.maximum(sq / count - mean * mean, 0.0)    # biased var; guard cancellation
    scale = gamma * lax.rsqrt(var + EPS)
    shift = beta - mean * scale
    return jnp.tile(scale, width)[None, :], jnp.tile(shift, width)[None, :]


def encoder_block(x_nchw, params):
    """x_nchw: (N, Cin, 2H, 2W) float32 -> (N, Cout, H, W) float32."""
    w1, b1, g1, be1, w2, b2, g2, be2 = params
    # NOTE: conv biases b1/b2 are mathematically cancelled by the training-mode BN mean
    # subtraction, so they are dropped in the kernel (dead work per the perf review).
    del b1, b2
    N, Cin, H2, W2 = x_nchw.shape
    Cout = w1.shape[-1]
    H, W = H2 // 2, W2 // 2

    # ---- wrapper-side layout plumbing (XLA) ----
    # NCHW -> NHWC -> split the 2x2 pooling parity into a leading (2,2) axis and
    # lane-merge (W, Cin): (N, 2, 2, H, W*Cin).
    x = jnp.transpose(x_nchw, (0, 2, 3, 1))
    xq = (x.reshape(N, H, 2, W, 2, Cin)
           .transpose(0, 2, 4, 1, 3, 5)
           .reshape(N, 2, 2, H, W * Cin))
    # HWIO weights -> flat (9*C, Cout), row order (kh*3 + kw)*C + ci (matches im2col).
    w1f = w1.reshape(9 * Cin, Cout)
    w2f = w2.reshape(9 * Cout, Cout)

    cp = pltpu.CompilerParams(
        dimension_semantics=("parallel",),          # shard batch tiles across TCs (v7x megacore)
        vmem_limit_bytes=32 * 1024 * 1024,          # explicit VMEM budget (fits v7x's 64 MiB)
    )
    fdt = jnp.float32

    # ---- pass 1: maxpool + conv1 (raw) + per-sample partial BN stats ----
    z1, st1 = pl.pallas_call(
        pool_conv1_kernel,
        grid=(N,),
        in_specs=[
            pl.BlockSpec((1, 2, 2, H, W * Cin), lambda n: (n, 0, 0, 0, 0)),
            pl.BlockSpec((9 * Cin, Cout), lambda n: (0, 0)),
        ],
        out_specs=(
            pl.BlockSpec((1, H, W * Cout), lambda n: (n, 0, 0)),
            pl.BlockSpec((1, 2, Cout), lambda n: (n, 0, 0)),
        ),
        out_shape=(
            jax.ShapeDtypeStruct((N, H, W * Cout), fdt),
            jax.ShapeDtypeStruct((N, 2, Cout), fdt),
        ),
        scratch_shapes=[
            pltpu.VMEM((H, W, Cin), fdt),        # pooled activations
            pltpu.VMEM((H, W, 9 * Cin), fdt),    # im2col patch buffer
        ],
        compiler_params=cp,
    )(xq, w1f)

    sc1, sh1 = _bn_scale_shift(st1, g1, be1, N * H * W, W)

    # ---- pass 2: BN1+ReLU (folded FMA) + conv2 (raw) + partial BN stats ----
    z2, st2 = pl.pallas_call(
        conv2_kernel,
        grid=(N,),
        in_specs=[
            pl.BlockSpec((1, H, W * Cout), lambda n: (n, 0, 0)),
            pl.BlockSpec((1, W * Cout), lambda n: (0, 0)),
            pl.BlockSpec((1, W * Cout), lambda n: (0, 0)),
            pl.BlockSpec((9 * Cout, Cout), lambda n: (0, 0)),
        ],
        out_specs=(
            pl.BlockSpec((1, H, W * Cout), lambda n: (n, 0, 0)),
            pl.BlockSpec((1, 2, Cout), lambda n: (n, 0, 0)),
        ),
        out_shape=(
            jax.ShapeDtypeStruct((N, H, W * Cout), fdt),
            jax.ShapeDtypeStruct((N, 2, Cout), fdt),
        ),
        scratch_shapes=[
            pltpu.VMEM((H, W, Cout), fdt),
            pltpu.VMEM((H, W, 9 * Cout), fdt),
        ],
        compiler_params=cp,
    )(z1, sc1, sh1, w2f)

    sc2, sh2 = _bn_scale_shift(st2, g2, be2, N * H * W, W)

    # ---- pass 3: BN2 + ReLU (lane-dense elementwise) ----
    out = pl.pallas_call(
        bn_relu_kernel,
        grid=(N,),
        in_specs=[
            pl.BlockSpec((1, H, W * Cout), lambda n: (n, 0, 0)),
            pl.BlockSpec((1, W * Cout), lambda n: (0, 0)),
            pl.BlockSpec((1, W * Cout), lambda n: (0, 0)),
        ],
        out_specs=pl.BlockSpec((1, H, W * Cout), lambda n: (n, 0, 0)),
        out_shape=jax.ShapeDtypeStruct((N, H, W * Cout), fdt),
        compiler_params=cp,
    )(z2, sc2, sh2)

    # (N, H, W*Cout) -> NCHW
    return jnp.transpose(out.reshape(N, H, W, Cout), (0, 3, 1, 2))


# ---------------------------------------------------------------------------
# Pure-JAX reference (mirrors the PyTorch forward: train-mode BatchNorm)
# ---------------------------------------------------------------------------
def encoder_block_reference(x_nchw, params):
    w1, b1, g1, be1, w2, b2, g2, be2 = params
    x = jnp.transpose(x_nchw, (0, 2, 3, 1))
    x = lax.reduce_window(x, -jnp.inf, lax.max, (1, 2, 2, 1), (1, 2, 2, 1), "VALID")

    def conv_bn_relu(h, w, b, g, be):
        y = lax.conv_general_dilated(
            h, w, (1, 1), "SAME",
            dimension_numbers=("NHWC", "HWIO", "NHWC")) + b
        mean = jnp.mean(y, axis=(0, 1, 2))
        var = jnp.mean((y - mean) ** 2, axis=(0, 1, 2))
        y = (y - mean) * lax.rsqrt(var + EPS) * g + be
        return jnp.maximum(y, 0.0)

    h = conv_bn_relu(x, w1, b1, g1, be1)
    h = conv_bn_relu(h, w2, b2, g2, be2)
    return jnp.transpose(h, (0, 3, 1, 2))


def init_params(key, in_channels, out_channels):
    ks = jax.random.split(key, 8)
    w1 = 0.1 * jax.random.normal(ks[0], (3, 3, in_channels, out_channels), jnp.float32)
    b1 = 0.1 * jax.random.normal(ks[1], (out_channels,), jnp.float32)
    g1 = 1.0 + 0.1 * jax.random.normal(ks[2], (out_channels,), jnp.float32)
    be1 = 0.1 * jax.random.normal(ks[3], (out_channels,), jnp.float32)
    w2 = 0.1 * jax.random.normal(ks[4], (3, 3, out_channels, out_channels), jnp.float32)
    b2 = 0.1 * jax.random.normal(ks[5], (out_channels,), jnp.float32)
    g2 = 1.0 + 0.1 * jax.random.normal(ks[6], (out_channels,), jnp.float32)
    be2 = 0.1 * jax.random.normal(ks[7], (out_channels,), jnp.float32)
    return (w1, b1, g1, be1, w2, b2, g2, be2)


if __name__ == "__main__":
    key = jax.random.PRNGKey(0)
    k_x, k_p = jax.random.split(key)

    N, Cin, Cout, S = 2, 4, 8, 16
    x = jax.random.normal(k_x, (N, Cin, S, S), jnp.float32)   # NCHW, like PyTorch
    params = init_params(k_p, Cin, Cout)

    out = jax.block_until_ready(encoder_block(x, params))
    ref = jax.block_until_ready(encoder_block_reference(x, params))

    assert out.shape == (N, Cout, S // 2, S // 2), out.shape
    np.testing.assert_allclose(np.asarray(out), np.asarray(ref), rtol=1e-4, atol=1e-4)
    print("KERNEL_OK")
</pallas_src>

<mosaic_0001>
module attributes {stable_mosaic.version = 11 : i64} {
  func.func @pool_conv1_kernel(%arg0: i32, %arg1: memref<1x2x2x8x32xf32, #tpu.memory_space<vmem>>, %arg2: memref<36x8xf32, #tpu.memory_space<vmem>>, %arg3: memref<1x8x64xf32, #tpu.memory_space<vmem>>, %arg4: memref<1x2x8xf32, #tpu.memory_space<vmem>>, %arg5: memref<8x8x4xf32, #tpu.memory_space<vmem>>, %arg6: memref<8x8x36xf32, #tpu.memory_space<vmem>>) attributes {dimension_semantics = [#tpu.dimension_semantics<parallel>], iteration_bounds = array<i64: 2>, scalar_prefetch = 0 : i64, scratch_operands = 2 : i64, tpu.core_type = #tpu.core_type<tc>, window_params = [{transform_indices = @transform_0, window_bounds = array<i64: 1, 2, 2, 8, 32>}, {pipeline_mode = #tpu.pipeline_mode<synchronous>, transform_indices = @transform_1, window_bounds = array<i64: 36, 8>}, {transform_indices = @transform_2, window_bounds = array<i64: 1, 8, 64>}, {transform_indices = @transform_3, window_bounds = array<i64: 1, 2, 8>}]} {
    %c0 = arith.constant 0 : index
    %c0_0 = arith.constant 0 : index
    %c0_1 = arith.constant 0 : index
    %c0_2 = arith.constant 0 : index
    %c0_3 = arith.constant 0 : index
    %0 = vector.load %arg1[%c0, %c0_0, %c0_1, %c0_2, %c0_3] : memref<1x2x2x8x32xf32, #tpu.memory_space<vmem>>, vector<1x1x1x8x32xf32>
    %1 = vector.shape_cast %0 : vector<1x1x1x8x32xf32> to vector<8x32xf32>
    %c0_4 = arith.constant 0 : index
    %c0_5 = arith.constant 0 : index
    %c1 = arith.constant 1 : index
    %c0_6 = arith.constant 0 : index
    %c0_7 = arith.constant 0 : index
    %2 = vector.load %arg1[%c0_4, %c0_5, %c1, %c0_6, %c0_7] : memref<1x2x2x8x32xf32, #tpu.memory_space<vmem>>, vector<1x1x1x8x32xf32>
    %3 = vector.shape_cast %2 : vector<1x1x1x8x32xf32> to vector<8x32xf32>
    %4 = arith.maximumf %1, %3 : vector<8x32xf32>
    %c0_8 = arith.constant 0 : index
    %c1_9 = arith.constant 1 : index
    %c0_10 = arith.constant 0 : index
    %c0_11 = arith.constant 0 : index
    %c0_12 = arith.constant 0 : index
    %5 = vector.load %arg1[%c0_8, %c1_9, %c0_10, %c0_11, %c0_12] : memref<1x2x2x8x32xf32, #tpu.memory_space<vmem>>, vector<1x1x1x8x32xf32>
    %6 = vector.shape_cast %5 : vector<1x1x1x8x32xf32> to vector<8x32xf32>
    %c0_13 = arith.constant 0 : index
    %c1_14 = arith.constant 1 : index
    %c1_15 = arith.constant 1 : index
    %c0_16 = arith.constant 0 : index
    %c0_17 = arith.constant 0 : index
    %7 = vector.load %arg1[%c0_13, %c1_14, %c1_15, %c0_16, %c0_17] : memref<1x2x2x8x32xf32, #tpu.memory_space<vmem>>, vector<1x1x1x8x32xf32>
    %8 = vector.shape_cast %7 : vector<1x1x1x8x32xf32> to vector<8x32xf32>
    %9 = arith.maximumf %6, %8 : vector<8x32xf32>
    %10 = arith.maximumf %4, %9 : vector<8x32xf32>
    %11 = vector.extract_strided_slice %10 {offsets = [0, 0], sizes = [8, 4], strides = [1, 1]} : vector<8x32xf32> to vector<8x4xf32>
    %c0_18 = arith.constant 0 : index
    %c0_19 = arith.constant 0 : index
    %c0_20 = arith.constant 0 : index
    %12 = vector.load %arg5[%c0_18, %c0_19, %c0_20] : memref<8x8x4xf32, #tpu.memory_space<vmem>>, vector<8x1x4xf32>
    %13 = vector.shape_cast %12 : vector<8x1x4xf32> to vector<8x4xf32>
    %14 = vector.shape_cast %11 : vector<8x4xf32> to vector<8x1x4xf32>
    tpu.vector_store %arg5[%c0_18, %c0_19, %c0_20], %14 {strides = array<i32>} : memref<8x8x4xf32, #tpu.memory_space<vmem>>, vector<8x1x4xf32>,
    %15 = vector.extract_strided_slice %10 {offsets = [0, 4], sizes = [8, 4], strides = [1, 1]} : vector<8x32xf32> to vector<8x4xf32>
    %c0_21 = arith.constant 0 : index
    %c1_22 = arith.constant 1 : index
    %c0_23 = arith.constant 0 : index
    %16 = vector.load %arg5[%c0_21, %c1_22, %c0_23] : memref<8x8x4xf32, #tpu.memory_space<vmem>>, vector<8x1x4xf32>
    %17 = vector.shape_cast %16 : vector<8x1x4xf32> to vector<8x4xf32>
    %18 = vector.shape_cast %15 : vector<8x4xf32> to vector<8x1x4xf32>
    tpu.vector_store %arg5[%c0_21, %c1_22, %c0_23], %18 {strides = array<i32>} : memref<8x8x4xf32, #tpu.memory_space<vmem>>, vector<8x1x4xf32>,
    %19 = vector.extract_strided_slice %10 {offsets = [0, 8], sizes = [8, 4], strides = [1, 1]} : vector<8x32xf32> to vector<8x4xf32>
    %c0_24 = arith.constant 0 : index
    %c2 = arith.constant 2 : index
    %c0_25 = arith.constant 0 : index
    %20 = vector.load %arg5[%c0_24, %c2, %c0_25] : memref<8x8x4xf32, #tpu.memory_space<vmem>>, vector<8x1x4xf32>
    %21 = vector.shape_cast %20 : vector<8x1x4xf32> to vector<8x4xf32>
    %22 = vector.shape_cast %19 : vector<8x4xf32> to vector<8x1x4xf32>
    tpu.vector_store %arg5[%c0_24, %c2, %c0_25], %22 {strides = array<i32>} : memref<8x8x4xf32, #tpu.memory_space<vmem>>, vector<8x1x4xf32>,
    %23 = vector.extract_strided_slice %10 {offsets = [0, 12], sizes = [8, 4], strides = [1, 1]} : vector<8x32xf32> to vector<8x4xf32>
    %c0_26 = arith.constant 0 : index
    %c3 = arith.constant 3 : index
    %c0_27 = arith.constant 0 : index
    %24 = vector.load %arg5[%c0_26, %c3, %c0_27] : memref<8x8x4xf32, #tpu.memory_space<vmem>>, vector<8x1x4xf32>
    %25 = vector.shape_cast %24 : vector<8x1x4xf32> to vector<8x4xf32>
    %26 = vector.shape_cast %23 : vector<8x4xf32> to vector<8x1x4xf32>
    tpu.vector_store %arg5[%c0_26, %c3, %c0_27], %26 {strides = array<i32>} : memref<8x8x4xf32, #tpu.memory_space<vmem>>, vector<8x1x4xf32>,
    %27 = vector.extract_strided_slice %10 {offsets = [0, 16], sizes = [8, 4], strides = [1, 1]} : vector<8x32xf32> to vector<8x4xf32>
    %c0_28 = arith.constant 0 : index
    %c4 = arith.constant 4 : index
    %c0_29 = arith.constant 0 : index
    %28 = vector.load %arg5[%c0_28, %c4, %c0_29] : memref<8x8x4xf32, #tpu.memory_space<vmem>>, vector<8x1x4xf32>
    %29 = vector.shape_cast %28 : vector<8x1x4xf32> to vector<8x4xf32>
    %30 = vector.shape_cast %27 : vector<8x4xf32> to vector<8x1x4xf32>
    tpu.vector_store %arg5[%c0_28, %c4, %c0_29], %30 {strides = array<i32>} : memref<8x8x4xf32, #tpu.memory_space<vmem>>, vector<8x1x4xf32>,
    %31 = vector.extract_strided_slice %10 {offsets = [0, 20], sizes = [8, 4], strides = [1, 1]} : vector<8x32xf32> to vector<8x4xf32>
    %c0_30 = arith.constant 0 : index
    %c5 = arith.constant 5 : index
    %c0_31 = arith.constant 0 : index
    %32 = vector.load %arg5[%c0_30, %c5, %c0_31] : memref<8x8x4xf32, #tpu.memory_space<vmem>>, vector<8x1x4xf32>
    %33 = vector.shape_cast %32 : vector<8x1x4xf32> to vector<8x4xf32>
    %34 = vector.shape_cast %31 : vector<8x4xf32> to vector<8x1x4xf32>
    tpu.vector_store %arg5[%c0_30, %c5, %c0_31], %34 {strides = array<i32>} : memref<8x8x4xf32, #tpu.memory_space<vmem>>, vector<8x1x4xf32>,
    %35 = vector.extract_strided_slice %10 {offsets = [0, 24], sizes = [8, 4], strides = [1, 1]} : vector<8x32xf32> to vector<8x4xf32>
    %c0_32 = arith.constant 0 : index
    %c6 = arith.constant 6 : index
    %c0_33 = arith.constant 0 : index
    %36 = vector.load %arg5[%c0_32, %c6, %c0_33] : memref<8x8x4xf32, #tpu.memory_space<vmem>>, vector<8x1x4xf32>
    %37 = vector.shape_cast %36 : vector<8x1x4xf32> to vector<8x4xf32>
    %38 = vector.shape_cast %35 : vector<8x4xf32> to vector<8x1x4xf32>
    tpu.vector_store %arg5[%c0_32, %c6, %c0_33], %38 {strides = array<i32>} : memref<8x8x4xf32, #tpu.memory_space<vmem>>, vector<8x1x4xf32>,
    %39 = vector.extract_strided_slice %10 {offsets = [0, 28], sizes = [8, 4], strides = [1, 1]} : vector<8x32xf32> to vector<8x4xf32>
    %c0_34 = arith.constant 0 : index
    %c7 = arith.constant 7 : index
    %c0_35 = arith.constant 0 : index
    %40 = vector.load %arg5[%c0_34, %c7, %c0_35] : memref<8x8x4xf32, #tpu.memory_space<vmem>>, vector<8x1x4xf32>
    %41 = vector.shape_cast %40 : vector<8x1x4xf32> to vector<8x4xf32>
    %42 = vector.shape_cast %39 : vector<8x4xf32> to vector<8x1x4xf32>
    tpu.vector_store %arg5[%c0_34, %c7, %c0_35], %42 {strides = array<i32>} : memref<8x8x4xf32, #tpu.memory_space<vmem>>, vector<8x1x4xf32>,
    %cst = arith.constant 0.000000e+00 : f32
    %43 = vector.broadcast %cst : f32 to vector<8x8x36xf32>
    %c0_36 = arith.constant 0 : index
    %c0_37 = arith.constant 0 : index
    %c0_38 = arith.constant 0 : index
    %44 = vector.load %arg6[%c0_36, %c0_37, %c0_38] : memref<8x8x36xf32, #tpu.memory_space<vmem>>, vector<8x8x36xf32>
    tpu.vector_store %arg6[%c0_36, %c0_37, %c0_38], %43 {strides = array<i32>} : memref<8x8x36xf32, #tpu.memory_space<vmem>>, vector<8x8x36xf32>,
    %c0_39 = arith.constant 0 : index
    %c0_40 = arith.constant 0 : index
    %c0_41 = arith.constant 0 : index
    %45 = vector.load %arg5[%c0_39, %c0_40, %c0_41] : memref<8x8x4xf32, #tpu.memory_space<vmem>>, vector<7x7x4xf32>
    %c1_42 = arith.constant 1 : index
    %c1_43 = arith.constant 1 : index
    %c0_44 = arith.constant 0 : index
    %46 = vector.load %arg6[%c1_42, %c1_43, %c0_44] : memref<8x8x36xf32, #tpu.memory_space<vmem>>, vector<7x7x4xf32>
    tpu.vector_store %arg6[%c1_42, %c1_43, %c0_44], %45 {strides = array<i32>} : memref<8x8x36xf32, #tpu.memory_space<vmem>>, vector<7x7x4xf32>,
    %c0_45 = arith.constant 0 : index
    %c0_46 = arith.constant 0 : index
    %c0_47 = arith.constant 0 : index
    %47 = vector.load %arg5[%c0_45, %c0_46, %c0_47] : memref<8x8x4xf32, #tpu.memory_space<vmem>>, vector<7x8x4xf32>
    %c1_48 = arith.constant 1 : index
    %c0_49 = arith.constant 0 : index
    %c4_50 = arith.constant 4 : index
    %48 = vector.load %arg6[%c1_48, %c0_49, %c4_50] : memref<8x8x36xf32, #tpu.memory_space<vmem>>, vector<7x8x4xf32>
    tpu.vector_store %arg6[%c1_48, %c0_49, %c4_50], %47 {strides = array<i32>} : memref<8x8x36xf32, #tpu.memory_space<vmem>>, vector<7x8x4xf32>,
    %c0_51 = arith.constant 0 : index
    %c1_52 = arith.constant 1 : index
    %c0_53 = arith.constant 0 : index
    %49 = vector.load %arg5[%c0_51, %c1_52, %c0_53] : memref<8x8x4xf32, #tpu.memory_space<vmem>>, vector<7x7x4xf32>
    %c1_54 = arith.constant 1 : index
    %c0_55 = arith.constant 0 : index
    %c8 = arith.constant 8 : index
    %50 = vector.load %arg6[%c1_54, %c0_55, %c8] : memref<8x8x36xf32, #tpu.memory_space<vmem>>, vector<7x7x4xf32>
    tpu.vector_store %arg6[%c1_54, %c0_55, %c8], %49 {strides = array<i32>} : memref<8x8x36xf32, #tpu.memory_space<vmem>>, vector<7x7x4xf32>,
    %c0_56 = arith.constant 0 : index
    %c0_57 = arith.constant 0 : index
    %c0_58 = arith.constant 0 : index
    %51 = vector.load %arg5[%c0_56, %c0_57, %c0_58] : memref<8x8x4xf32, #tpu.memory_space<vmem>>, vector<8x7x4xf32>
    %c0_59 = arith.constant 0 : index
    %c1_60 = arith.constant 1 : index
    %c12 = arith.constant 12 : index
    %52 = vector.load %arg6[%c0_59, %c1_60, %c12] : memref<8x8x36xf32, #tpu.memory_space<vmem>>, vector<8x7x4xf32>
    tpu.vector_store %arg6[%c0_59, %c1_60, %c12], %51 {strides = array<i32>} : memref<8x8x36xf32, #tpu.memory_space<vmem>>, vector<8x7x4xf32>,
    %c0_61 = arith.constant 0 : index
    %c0_62 = arith.constant 0 : index
    %c0_63 = arith.constant 0 : index
    %53 = vector.load %arg5[%c0_61, %c0_62, %c0_63] : memref<8x8x4xf32, #tpu.memory_space<vmem>>, vector<8x8x4xf32>
    %c0_64 = arith.constant 0 : index
    %c0_65 = arith.constant 0 : index
    %c16 = arith.constant 16 : index
    %54 = vector.load %arg6[%c0_64, %c0_65, %c16] : memref<8x8x36xf32, #tpu.memory_space<vmem>>, vector<8x8x4xf32>
    tpu.vector_store %arg6[%c0_64, %c0_65, %c16], %53 {strides = array<i32>} : memref<8x8x36xf32, #tpu.memory_space<vmem>>, vector<8x8x4xf32>,
    %c0_66 = arith.constant 0 : index
    %c1_67 = arith.constant 1 : index
    %c0_68 = arith.constant 0 : index
    %55 = vector.load %arg5[%c0_66, %c1_67, %c0_68] : memref<8x8x4xf32, #tpu.memory_space<vmem>>, vector<8x7x4xf32>
    %c0_69 = arith.constant 0 : index
    %c0_70 = arith.constant 0 : index
    %c20 = arith.constant 20 : index
    %56 = vector.load %arg6[%c0_69, %c0_70, %c20] : memref<8x8x36xf32, #tpu.memory_space<vmem>>, vector<8x7x4xf32>
    tpu.vector_store %arg6[%c0_69, %c0_70, %c20], %55 {strides = array<i32>} : memref<8x8x36xf32, #tpu.memory_space<vmem>>, vector<8x7x4xf32>,
    %c1_71 = arith.constant 1 : index
    %c0_72 = arith.constant 0 : index
    %c0_73 = arith.constant 0 : index
    %57 = vector.load %arg5[%c1_71, %c0_72, %c0_73] : memref<8x8x4xf32, #tpu.memory_space<vmem>>, vector<7x7x4xf32>
    %c0_74 = arith.constant 0 : index
    %c1_75 = arith.constant 1 : index
    %c24 = arith.constant 24 : index
    %58 = vector.load %arg6[%c0_74, %c1_75, %c24] : memref<8x8x36xf32, #tpu.memory_space<vmem>>, vector<7x7x4xf32>
    tpu.vector_store %arg6[%c0_74, %c1_75, %c24], %57 {strides = array<i32>} : memref<8x8x36xf32, #tpu.memory_space<vmem>>, vector<7x7x4xf32>,
    %c1_76 = arith.constant 1 : index
    %c0_77 = arith.constant 0 : index
    %c0_78 = arith.constant 0 : index
    %59 = vector.load %arg5[%c1_76, %c0_77, %c0_78] : memref<8x8x4xf32, #tpu.memory_space<vmem>>, vector<7x8x4xf32>
    %c0_79 = arith.constant 0 : index
    %c0_80 = arith.constant 0 : index
    %c28 = arith.constant 28 : index
    %60 = vector.load %arg6[%c0_79, %c0_80, %c28] : memref<8x8x36xf32, #tpu.memory_space<vmem>>, vector<7x8x4xf32>
    tpu.vector_store %arg6[%c0_79, %c0_80, %c28], %59 {strides = array<i32>} : memref<8x8x36xf32, #tpu.memory_space<vmem>>, vector<7x8x4xf32>,
    %c1_81 = arith.constant 1 : index
    %c1_82 = arith.constant 1 : index
    %c0_83 = arith.constant 0 : index
    %61 = vector.load %arg5[%c1_81, %c1_82, %c0_83] : memref<8x8x4xf32, #tpu.memory_space<vmem>>, vector<7x7x4xf32>
    %c0_84 = arith.constant 0 : index
    %c0_85 = arith.constant 0 : index
    %c32 = arith.constant 32 : index
    %62 = vector.load %arg6[%c0_84, %c0_85, %c32] : memref<8x8x36xf32, #tpu.memory_space<vmem>>, vector<7x7x4xf32>
    tpu.vector_store %arg6[%c0_84, %c0_85, %c32], %61 {strides = array<i32>} : memref<8x8x36xf32, #tpu.memory_space<vmem>>, vector<7x7x4xf32>,
    %c0_86 = arith.constant 0 : index
    %c0_87 = arith.constant 0 : index
    %c0_88 = arith.constant 0 : index
    %63 = vector.load %arg6[%c0_86, %c0_87, %c0_88] : memref<8x8x36xf32, #tpu.memory_space<vmem>>, vector<8x8x36xf32>
    %64 = vector.shape_cast %63 : vector<8x8x36xf32> to vector<64x36xf32>
    %c0_89 = arith.constant 0 : index
    %c0_90 = arith.constant 0 : index
    %65 = vector.load %arg2[%c0_89, %c0_90] : memref<36x8xf32, #tpu.memory_space<vmem>>, vector<36x8xf32>
    %cst_91 = arith.constant dense<0.000000e+00> : vector<64x8xf32>
    %66 = tpu.matmul %64, %65, %cst_91 {dimension_numbers = #tpu.dot_dimension_numbers<[1], [0], [0], [1], [0, 0, 1, 1], [], []>} : vector<64x36xf32>, vector<36x8xf32>, vector<64x8xf32> -> vector<64x8xf32>
    %cst_92 = arith.constant dense<0.000000e+00> : vector<8xf32>
    %67 = vector.multi_reduction <add>, %66, %cst_92 [0] : vector<64x8xf32> to vector<8xf32>
    %68 = vector.shape_cast %67 : vector<8xf32> to vector<1x8xf32>
    %69 = arith.mulf %66, %66 : vector<64x8xf32>
    %cst_93 = arith.constant dense<0.000000e+00> : vector<8xf32>
    %70 = vector.multi_reduction <add>, %69, %cst_93 [0] : vector<64x8xf32> to vector<8xf32>
    %71 = vector.shape_cast %70 : vector<8xf32> to vector<1x8xf32>
    %72 = tpu.concatenate %68, %71 in 0 : vector<1x8xf32>, vector<1x8xf32> -> vector<2x8xf32>
    %c0_94 = arith.constant 0 : index
    %c0_95 = arith.constant 0 : index
    %c0_96 = arith.constant 0 : index
    %73 = vector.load %arg4[%c0_94, %c0_95, %c0_96] : memref<1x2x8xf32, #tpu.memory_space<vmem>>, vector<1x2x8xf32>
    %74 = vector.shape_cast %73 : vector<1x2x8xf32> to vector<2x8xf32>
    %75 = vector.shape_cast %72 : vector<2x8xf32> to vector<1x2x8xf32>
    tpu.vector_store %arg4[%c0_94, %c0_95, %c0_96], %75 {strides = array<i32>} : memref<1x2x8xf32, #tpu.memory_space<vmem>>, vector<1x2x8xf32>,
    %76 = vector.shape_cast %66 : vector<64x8xf32> to vector<8x8x8xf32>
    %77 = vector.extract_strided_slice %76 {offsets = [0, 0, 0], sizes = [8, 1, 8], strides = [1, 1, 1]} : vector<8x8x8xf32> to vector<8x1x8xf32>
    %78 = vector.shape_cast %77 : vector<8x1x8xf32> to vector<8x8xf32>
    %79 = vector.extract_strided_slice %76 {offsets = [0, 1, 0], sizes = [8, 1, 8], strides = [1, 1, 1]} : vector<8x8x8xf32> to vector<8x1x8xf32>
    %80 = vector.shape_cast %79 : vector<8x1x8xf32> to vector<8x8xf32>
    %81 = vector.extract_strided_slice %76 {offsets = [0, 2, 0], sizes = [8, 1, 8], strides = [1, 1, 1]} : vector<8x8x8xf32> to vector<8x1x8xf32>
    %82 = vector.shape_cast %81 : vector<8x1x8xf32> to vector<8x8xf32>
    %83 = vector.extract_strided_slice %76 {offsets = [0, 3, 0], sizes = [8, 1, 8], strides = [1, 1, 1]} : vector<8x8x8xf32> to vector<8x1x8xf32>
    %84 = vector.shape_cast %83 : vector<8x1x8xf32> to vector<8x8xf32>
    %85 = vector.extract_strided_slice %76 {offsets = [0, 4, 0], sizes = [8, 1, 8], strides = [1, 1, 1]} : vector<8x8x8xf32> to vector<8x1x8xf32>
    %86 = vector.shape_cast %85 : vector<8x1x8xf32> to vector<8x8xf32>
    %87 = vector.extract_strided_slice %76 {offsets = [0, 5, 0], sizes = [8, 1, 8], strides = [1, 1, 1]} : vector<8x8x8xf32> to vector<8x1x8xf32>
    %88 = vector.shape_cast %87 : vector<8x1x8xf32> to vector<8x8xf32>
    %89 = vector.extract_strided_slice %76 {offsets = [0, 6, 0], sizes = [8, 1, 8], strides = [1, 1, 1]} : vector<8x8x8xf32> to vector<8x1x8xf32>
    %90 = vector.shape_cast %89 : vector<8x1x8xf32> to vector<8x8xf32>
    %91 = vector.extract_strided_slice %76 {offsets = [0, 7, 0], sizes = [8, 1, 8], strides = [1, 1, 1]} : vector<8x8x8xf32> to vector<8x1x8xf32>
    %92 = vector.shape_cast %91 : vector<8x1x8xf32> to vector<8x8xf32>
    %93 = tpu.concatenate %78, %80, %82, %84, %86, %88, %90, %92 in 1 : vector<8x8xf32>, vector<8x8xf32>, vector<8x8xf32>, vector<8x8xf32>, vector<8x8xf32>, vector<8x8xf32>, vector<8x8xf32>, vector<8x8xf32> -> vector<8x64xf32>
    %c0_97 = arith.constant 0 : index
    %c0_98 = arith.constant 0 : index
    %c0_99 = arith.constant 0 : index
    %94 = vector.load %arg3[%c0_97, %c0_98, %c0_99] : memref<1x8x64xf32, #tpu.memory_space<vmem>>, vector<1x8x64xf32>
    %95 = vector.shape_cast %94 : vector<1x8x64xf32> to vector<8x64xf32>
    %96 = vector.shape_cast %93 : vector<8x64xf32> to vector<1x8x64xf32>
    tpu.vector_store %arg3[%c0_97, %c0_98, %c0_99], %96 {strides = array<i32>} : memref<1x8x64xf32, #tpu.memory_space<vmem>>, vector<1x8x64xf32>,
    return
  }
  func.func @transform_0(%arg0: i32) -> (i32, i32, i32, i32, i32) {
    %c0_i32 = arith.constant 0 : i32
    %c0_i32_0 = arith.constant 0 : i32
    %c0_i32_1 = arith.constant 0 : i32
    %c0_i32_2 = arith.constant 0 : i32
    %c0_i32_3 = arith.constant 0 : i32
    return %arg0, %c0_i32, %c0_i32_0, %c0_i32_1, %c0_i32_2 : i32, i32, i32, i32, i32
  }
  func.func @transform_1(%arg0: i32) -> (i32, i32) {
    %c0_i32 = arith.constant 0 : i32
    %c0_i32_0 = arith.constant 0 : i32
    %c0_i32_1 = arith.constant 0 : i32
    return %c0_i32, %c0_i32_0 : i32, i32
  }
  func.func @transform_2(%arg0: i32) -> (i32, i32, i32) {
    %c0_i32 = arith.constant 0 : i32
    %c0_i32_0 = arith.constant 0 : i32
    %c0_i32_1 = arith.constant 0 : i32
    return %arg0, %c0_i32, %c0_i32_0 : i32, i32, i32
  }
  func.func @transform_3(%arg0: i32) -> (i32, i32, i32) {
    %c0_i32 = arith.constant 0 : i32
    %c0_i32_0 = arith.constant 0 : i32
    %c0_i32_1 = arith.constant 0 : i32
    return %arg0, %c0_i32, %c0_i32_0 : i32, i32, i32
  }
}

</mosaic_0001>

<llo_original>
// kernel: tpu_custom_call.1
$region0: #{tpu_custom_call.1}
  #allocation0 [shape = 'u32[]', space=smem, size = 0x4, offset = 0x4, fixed_abs, tag = 'smem constant byte address 0x4 - core index']
  #allocation1 [shape = 'u32[144,128]{1,0:T(1,128)}', space=vmem, size = 0x12000, scoped, tag = 'internal scratch']
  #allocation2 [shape = 'f32[8,8,4]{2,1,0:T(8,128)}', space=vmem, size = 0x8000, scoped, tag = 'scratch operand']
  #allocation3 [shape = 'f32[8,8,36]{2,1,0:T(8,128)}', space=vmem, size = 0x8000, scoped, tag = 'scratch operand']
  %s0 = inlined_call_operand.hbm [shape: f32[2,2,2,8,32], index: 0, kind: input, shape index: {}]
  %s1 = inlined_call_operand.vmem [shape: f32[36,8], index: 1, kind: input, shape index: {}]
  %s2 = inlined_call_operand.hbm [shape: f32[2,8,64], index: 2, kind: output, shape index: {0}]
  %s3 = inlined_call_operand.hbm [shape: f32[2,2,8], index: 3, kind: output, shape index: {1}]
  %4 = xla_tuple %s2, %s3
  %s5 = sld [smem:[#allocation0]]
  $region53: #{tpu_custom_call.1} parent=0
    _
  %s7 = ssub.s32 1, %s5
  %s8 = scalar_select 0, %s7, %s5
  $region1: #{tpu_custom_call.1} parent=0
    #allocation4 [shape = 'u8[32768]{0}', space=vmem, size = 0x8000, scoped, tag = 'input window, operand 0']
    #allocation5 [shape = 's32[2]{0}', space=sflag, size = 0x8, scoped, tag = 'scoped memory for tpu_custom_call.1']
    #allocation6 [shape = 's32[2]{0}', space=sflag, size = 0x8, scoped, tag = 'scoped memory for tpu_custom_call.1']
    #allocation7 [shape = 'u8[8192]{0}', space=vmem, size = 0x2000, scoped, tag = 'output window, operand 0']
    #allocation8 [shape = 'u8[2048]{0}', space=vmem, size = 0x800, scoped, tag = 'output window, operand 1']
    #allocation9 [shape = 's32[2]{0}', space=sflag, size = 0x8, scoped, tag = 'scoped memory for tpu_custom_call.1']
    %9 = vsyncpa [#allocation5], 0
    %s10 = scalar_lea.sflag [#allocation5], 1
    %11 = vsyncpa %s10, 0
    %12 = vsyncpa [#allocation6], 0
    %s13 = scalar_lea.sflag [#allocation6], 1
    %14 = vsyncpa %s13, 0
    %15 = vsyncpa [#allocation9], 0
    %s16 = scalar_lea.sflag [#allocation9], 1
    %17 = vsyncpa %s16, 0
    loop: start=0, step=1, limit=4
    $region2: #{tpu_custom_call.1} parent=1 // loop_pre_header
      _
    $region3: #{tpu_custom_call.1} parent=1 // loop_header
      %s19 = sphi 0, %s23
      %p20 = scmp.ge.s32.totalorder %s19, 4
      %s29 = sphi 0, %s31
      %s32 = sphi 0, %s29
      %s33 = sphi 0, %s32
      %s49 = sphi 0, %s33
      %s53 = sphi 0, %s53
      %s55 = sphi 0, %s53
      %s56 = sphi 0, %s55
      %s70 = sphi 0, %s56
      %s76 = sphi 0, %s78
      %s79 = sphi 0, %s76
      %s80 = sphi 0, %s79
      %s96 = sphi 0, %s80
      %s102 = sphi 0, %s104
      %s105 = sphi 0, %s102
      %s106 = sphi 0, %s105
      %s122 = sphi 0, %s106
    $region4: #{tpu_custom_call.1} parent=1 // loop_header_branch
      %22 = sbr.rel (%p20) target = $region8
    $region5: #{tpu_custom_call.1} parent=1 // loop_body
      %s24 = ssub.s32 %s19, 1
      %s25 = ssub.s32 %s19, 2
      %s26 = sadd.s32 %s19, 1
      %s27 = ssub.s32 %s19, %s26
      %p28 = scmp.eq.s32.totalorder %s27, 0
      %s30 = sadd.s32 %s29, 1
      %s31 = scalar_select %p28, %s29, %s30
      %p34 = pneg %p28
      %p35 = scmp.eq.s32.totalorder %s19, 1
      %p36 = por %p34, %p35
      %p37 = scmp.ne.s32.totalorder %s29, %s32
      %p38 = scmp.eq.s32.totalorder %s19, 0
      %p39 = por %p37, %p38
      %p40 = scmp.ne.s32.totalorder %s29, %s32
      %p41 = scmp.eq.s32.totalorder %s24, 1
      %p42 = por %p40, %p41
      %p43 = scmp.ne.s32.totalorder %s32, %s33
      %p44 = scmp.eq.s32.totalorder %s24, 0
      %p45 = por %p43, %p44
      %p46 = scmp.ne.s32.totalorder %s32, %s33
      %p47 = scmp.eq.s32.totalorder %s25, 1
      %p48 = por %p46, %p47
      %p50 = scmp.ne.s32.totalorder %s33, %s49
      %p51 = scmp.eq.s32.totalorder %s25, 0
      %p52 = por %p50, %p51
      %s54 = sadd.s32 %s53, 1
      %p57 = scmp.eq.s32.totalorder %s19, 1
      %p58 = scmp.ne.s32.totalorder %s53, %s55
      %p59 = scmp.eq.s32.totalorder %s19, 0
      %p60 = por %p58, %p59
      %p61 = scmp.ne.s32.totalorder %s53, %s55
      %p62 = scmp.eq.s32.totalorder %s24, 1
      %p63 = por %p61, %p62
      %p64 = scmp.ne.s32.totalorder %s55, %s56
      %p65 = scmp.eq.s32.totalorder %s24, 0
      %p66 = por %p64, %p65
      %p67 = scmp.ne.s32.totalorder %s55, %s56
      %p68 = scmp.eq.s32.totalorder %s25, 1
      %p69 = por %p67, %p68
      %p71 = scmp.ne.s32.totalorder %s56, %s70
      %p72 = scmp.eq.s32.totalorder %s25, 0
      %p73 = por %p71, %p72
      %s74 = ssub.s32 %s19, %s26
      %p75 = scmp.eq.s32.totalorder %s74, 0
      %s77 = sadd.s32 %s76, 1
      %s78 = scalar_select %p75, %s76, %s77
      %p81 = pneg %p75
      %p82 = scmp.eq.s32.totalorder %s19, 1
      %p83 = por %p81, %p82
      %p84 = scmp.ne.s32.totalorder %s76, %s79
      %p85 = scmp.eq.s32.totalorder %s19, 0
      %p86 = por %p84, %p85
      %p87 = scmp.ne.s32.totalorder %s76, %s79
      %p88 = scmp.eq.s32.totalorder %s24, 1
      %p89 = por %p87, %p88
      %p90 = scmp.ne.s32.totalorder %s79, %s80
      %p91 = scmp.eq.s32.totalorder %s24, 0
      %p92 = por %p90, %p91
      %p93 = scmp.ne.s32.totalorder %s79, %s80
      %p94 = scmp.eq.s32.totalorder %s25, 1
      %p95 = por %p93, %p94
      %p97 = scmp.ne.s32.totalorder %s80, %s96
      %p98 = scmp.eq.s32.totalorder %s25, 0
      %p99 = por %p97, %p98
      %s100 = ssub.s32 %s19, %s26
      %p101 = scmp.eq.s32.totalorder %s100, 0
      %s103 = sadd.s32 %s102, 1
      %s104 = scalar_select %p101, %s102, %s103
      %p107 = pneg %p101
      %p108 = scmp.eq.s32.totalorder %s19, 1
      %p109 = por %p107, %p108
      %p110 = scmp.ne.s32.totalorder %s102, %s105
      %p111 = scmp.eq.s32.totalorder %s19, 0
      %p112 = por %p110, %p111
      %p113 = scmp.ne.s32.totalorder %s102, %s105
      %p114 = scmp.eq.s32.totalorder %s24, 1
      %p115 = por %p113, %p114
      %p116 = scmp.ne.s32.totalorder %s105, %s106
      %p117 = scmp.eq.s32.totalorder %s24, 0
      %p118 = por %p116, %p117
      %p119 = scmp.ne.s32.totalorder %s105, %s106
      %p120 = scmp.eq.s32.totalorder %s25, 1
      %p121 = por %p119, %p120
      %p123 = scmp.ne.s32.totalorder %s106, %s122
      %p124 = scmp.eq.s32.totalorder %s25, 0
      %p125 = por %p123, %p124
      %p126 = scmp.le.s32.totalorder 1, %s19
      %p127 = scmp.lt.s32.totalorder %s19, 3
      %p128 = pnand %p126, %p127
      %p129 = pneg %p128
      // Predicated region
      $region9: #{tpu_custom_call.1} parent=5 // pred_check
        _
      $region10: #{tpu_custom_call.1} parent=5 // pred_check_branch
        %131 = sbr.rel (%p128) target = $region12
      $region11: #{tpu_custom_call.1} parent=5 // pred_region
        %s132 = ssub.s32 %s19, 1
        // Predicated region
        $region13: #{tpu_custom_call.1} parent=11 // pred_check
          %p133 = pneg %p66
        $region14: #{tpu_custom_call.1} parent=11 // pred_check_branch
          %135 = sbr.rel (%p133) target = $region16
        $region15: #{tpu_custom_call.1} parent=11 // pred_region
          _
        $region16: #{tpu_custom_call.1} parent=11 // pred_fallthru
          _
      $region12: #{tpu_custom_call.1} parent=5 // pred_fallthru
        _
      %p136 = scmp.lt.s32.totalorder %s19, 2
      // Predicated region
      $region17: #{tpu_custom_call.1} parent=5 // pred_check
        %p137 = pneg %p136
      $region18: #{tpu_custom_call.1} parent=5 // pred_check_branch
        %139 = sbr.rel (%p137) target = $region20
      $region19: #{tpu_custom_call.1} parent=5 // pred_region
        // Predicated region
        $region21: #{tpu_custom_call.1} parent=19 // pred_check
          %p140 = pneg %p39
        $region22: #{tpu_custom_call.1} parent=19 // pred_check_branch
          %142 = sbr.rel (%p140) target = $region24
        $region23: #{tpu_custom_call.1} parent=19 // pred_region
          %s143 = sand.u32 %s29, 1
          %s144 = scalar_lea.sflag [#allocation5], %s143
          %s145 = sand.u32 %s29, 1
          %s146 = smul.addr %s145, 32
          %s147 = scalar_lea.vmem [#allocation4], %s146
          %s149 = ssub.s32 512, 512
          %150 = vsyncadd %s144, %s149
          %s151 = smul.addr %s19, 4
          %s152 = smul.addr %s151, 128
          %s153 = scalar_lea.hbm %s0, %s152
          %s154 = sshll.u32 %s147, 4
          %s155 = int_to_ptr.vmem [resolvable:$true] %s154
          %160 = dma.hbm_to_vmem [thread:$0]  %s153, 512, %s155, %s144, 128, 128, 8
        $region24: #{tpu_custom_call.1} parent=19 // pred_fallthru
          _
      $region20: #{tpu_custom_call.1} parent=5 // pred_fallthru
        _
      %p161 = scmp.le.s32.totalorder 1, %s19
      %p162 = scmp.lt.s32.totalorder %s19, 3
      %p163 = pnand %p161, %p162
      %p164 = pneg %p163
      // Predicated region
      $region25: #{tpu_custom_call.1} parent=5 // pred_check
        _
      $region26: #{tpu_custom_call.1} parent=5 // pred_check_branch
        %166 = sbr.rel (%p163) target = $region28
      $region27: #{tpu_custom_call.1} parent=5 // pred_region
        %s167 = ssub.s32 %s19, 1
        %s168 = sand.u32 %s32, 1
        %s169 = scalar_lea.sflag [#allocation5], %s168
        %s170 = sand.u32 %s32, 1
        %s171 = smul.addr %s170, 32
        %s172 = scalar_lea.vmem [#allocation4], %s171
        // Predicated region
        $region29: #{tpu_custom_call.1} parent=27 // pred_check
          %p173 = pneg %p45
        $region30: #{tpu_custom_call.1} parent=27 // pred_check_branch
          %175 = sbr.rel (%p173) target = $region32
        $region31: #{tpu_custom_call.1} parent=27 // pred_region
          %176 = dma.done %s169, 512
        $region32: #{tpu_custom_call.1} parent=27 // pred_fallthru
          _
        %s177 = sand.u32 %s32, 1
        %s178 = scalar_lea.sflag [#allocation5], %s177
        %s179 = sand.u32 %s32, 1
        %s180 = smul.addr %s179, 32
        %s181 = scalar_lea.vmem [#allocation4], %s180
        %p182 = pneg %p45
        %p183 = pneg %p42
        %p184 = pneg %p66
        %p185 = pneg %p63
        %p186 = pneg %p92
        %p187 = pneg %p89
        %s188 = sand.u32 %s79, 1
        %s189 = scalar_lea.sflag [#allocation6], %s188
        %s190 = sand.u32 %s79, 1
        %s191 = smul.addr %s190, 8
        %s192 = scalar_lea.vmem [#allocation7], %s191
        %p193 = pneg %p118
        %p194 = pneg %p115
        %s195 = sand.u32 %s105, 1
        %s196 = scalar_lea.sflag [#allocation9], %s195
        %s197 = sand.u32 %s105, 1
        %s198 = smul.addr %s197, 2
        %s199 = scalar_lea.vmem [#allocation8], %s198
        %v200 = vld [vmem:[%s172] sm:$0xff]
        %s201 = scalar_lea.vmem %s172, 8 [#allocation4]
        %v202 = vld [vmem:[%s201] sm:$0xff]
        %v203 = vmax.f32 %v200, %v202
        %s204 = scalar_lea.vmem %s172, 16 [#allocation4]
        %v205 = vld [vmem:[%s204] sm:$0xff]
        %s206 = scalar_lea.vmem %s172, 24 [#allocation4]
        %v207 = vld [vmem:[%s206] sm:$0xff]
        %v208 = vmax.f32 %v205, %v207
        %v209 = vmax.f32 %v203, %v208
        %v211 = vcombine.high %v209, %v209
        %v213 = vunpack.c.l.s4 1966171168
        %v214 = vunpack.c.0.s8 %v213
        %v215 = vlaneseq
        %v216 = vshrl.u32 %v215, 7
        %v217 = vsub.s32 %v214, %v216
        %v218 = vrot.slane %v209, %v217
        %v220 = vunpack.c.l.s4 1966171168
        %v221 = vunpack.c.0.s8 %v220
        %v222 = vlaneseq
        %v223 = vshrl.u32 %v222, 7
        %v224 = vsub.s32 %v221, %v223
        %v225 = vrot.slane %v211, %v224
        %v226 = vcombine.high %v218, %v218
        %v227 = vcombine.high %v225, %v225
        %v229 = vunpack.c.l.s4 1966171168
        %v230 = vunpack.c.0.s8 %v229
        %v231 = vlaneseq
        %v232 = vshrl.u32 %v231, 7
        %v233 = vsub.s32 %v230, %v232
        %v234 = vrot.slane %v218, %v233
        %v236 = vunpack.c.l.s4 1966171168
        %v237 = vunpack.c.0.s8 %v236
        %v238 = vlaneseq
        %v239 = vshrl.u32 %v238, 7
        %v240 = vsub.s32 %v237, %v239
        %v241 = vrot.slane %v225, %v240
        %v243 = vunpack.c.l.s4 1966171168
        %v244 = vunpack.c.0.s8 %v243
        %v245 = vlaneseq
        %v246 = vshrl.u32 %v245, 7
        %v247 = vsub.s32 %v244, %v246
        %v248 = vrot.slane %v226, %v247
        %v250 = vunpack.c.l.s4 1966171168
        %v251 = vunpack.c.0.s8 %v250
        %v252 = vlaneseq
        %v253 = vshrl.u32 %v252, 7
        %v254 = vsub.s32 %v251, %v253
        %v255 = vrot.slane %v227, %v254
        %v256 = vcombine.high %v234, %v234
        %v257 = vcombine.high %v241, %v241
        %v258 = vcombine.high %v248, %v248
        %v259 = vcombine.high %v255, %v255
        %vm268 = vcmask 24576
        %269 = vst.msk [vmem:[#allocation2] sm:$0x1] %vm268, %v234
        %270 = vst.msk [vmem:[#allocation2 + $0x8] sm:$0x1] %vm268, %v248
        %271 = vst.msk [vmem:[#allocation2 + $0x10] sm:$0x1] %vm268, %v256
        %272 = vst.msk [vmem:[#allocation2 + $0x18] sm:$0x1] %vm268, %v258
        %273 = vst.msk [vmem:[#allocation2 + $0x20] sm:$0x1] %vm268, %v241
        %274 = vst.msk [vmem:[#allocation2 + $0x28] sm:$0x1] %vm268, %v255
        %275 = vst.msk [vmem:[#allocation2 + $0x30] sm:$0x1] %vm268, %v257
        %276 = vst.msk [vmem:[#allocation2 + $0x38] sm:$0x1] %vm268, %v259
        %v277 = vlaneseq
        %v278 = vshrl.u32 %v277, 7
        %v279 = vsub.s32 0, %v278
        %v280 = vrot.slane %v234, %v279
        %v281 = vlaneseq
        %v282 = vshrl.u32 %v281, 7
        %v283 = vsub.s32 0, %v282
        %v284 = vrot.slane %v248, %v283
        %v285 = vlaneseq
        %v286 = vshrl.u32 %v285, 7
        %v287 = vsub.s32 0, %v286
        %v288 = vrot.slane %v256, %v287
        %v289 = vlaneseq
        %v290 = vshrl.u32 %v289, 7
        %v291 = vsub.s32 0, %v290
        %v292 = vrot.slane %v258, %v291
        %v293 = vlaneseq
        %v294 = vshrl.u32 %v293, 7
        %v295 = vsub.s32 0, %v294
        %v296 = vrot.slane %v241, %v295
        %v297 = vlaneseq
        %v298 = vshrl.u32 %v297, 7
        %v299 = vsub.s32 0, %v298
        %v300 = vrot.slane %v255, %v299
        %v301 = vlaneseq
        %v302 = vshrl.u32 %v301, 7
        %v303 = vsub.s32 0, %v302
        %v304 = vrot.slane %v257, %v303
        %v305 = vlaneseq
        %v306 = vshrl.u32 %v305, 7
        %v307 = vsub.s32 0, %v306
        %v308 = vrot.slane %v259, %v307
        %309 = vrot.lane.b32.xlu0 %v280, 124
        %v310 = vpop.permute.xlu0 %309
        %311 = vrot.lane.b32.xlu0 %v284, 124
        %v312 = vpop.permute.xlu0 %311
        %313 = vrot.lane.b32.xlu0 %v288, 124
        %v314 = vpop.permute.xlu0 %313
        %315 = vrot.lane.b32.xlu0 %v292, 124
        %v316 = vpop.permute.xlu0 %315
        %317 = vrot.lane.b32.xlu0 %v296, 124
        %v318 = vpop.permute.xlu0 %317
        %319 = vrot.lane.b32.xlu0 %v300, 124
        %v320 = vpop.permute.xlu0 %319
        %321 = vrot.lane.b32.xlu0 %v304, 124
        %v322 = vpop.permute.xlu0 %321
        %323 = vrot.lane.b32.xlu0 %v308, 124
        %v324 = vpop.permute.xlu0 %323
        %333 = vst.msk [vmem:[#allocation2 + $0x1] sm:$0x1] %vm268, %v310
        %334 = vst.msk [vmem:[#allocation2 + $0x9] sm:$0x1] %vm268, %v312
        %335 = vst.msk [vmem:[#allocation2 + $0x11] sm:$0x1] %vm268, %v314
        %336 = vst.msk [vmem:[#allocation2 + $0x19] sm:$0x1] %vm268, %v316
        %337 = vst.msk [vmem:[#allocation2 + $0x21] sm:$0x1] %vm268, %v318
        %338 = vst.msk [vmem:[#allocation2 + $0x29] sm:$0x1] %vm268, %v320
        %339 = vst.msk [vmem:[#allocation2 + $0x31] sm:$0x1] %vm268, %v322
        %340 = vst.msk [vmem:[#allocation2 + $0x39] sm:$0x1] %vm268, %v324
        %341 = vrot.lane.b32.xlu0 %v280, 120
        %v342 = vpop.permute.xlu0 %341
        %343 = vrot.lane.b32.xlu0 %v284, 120
        %v344 = vpop.permute.xlu0 %343
        %345 = vrot.lane.b32.xlu0 %v288, 120
        %v346 = vpop.permute.xlu0 %345
        %347 = vrot.lane.b32.xlu0 %v292, 120
        %v348 = vpop.permute.xlu0 %347
        %349 = vrot.lane.b32.xlu0 %v296, 120
        %v350 = vpop.permute.xlu0 %349
        %351 = vrot.lane.b32.xlu0 %v300, 120
        %v352 = vpop.permute.xlu0 %351
        %353 = vrot.lane.b32.xlu0 %v304, 120
        %v354 = vpop.permute.xlu0 %353
        %355 = vrot.lane.b32.xlu0 %v308, 120
        %v356 = vpop.permute.xlu0 %355
        %365 = vst.msk [vmem:[#allocation2 + $0x2] sm:$0x1] %vm268, %v342
        %366 = vst.msk [vmem:[#allocation2 + $0xa] sm:$0x1] %vm268, %v344
        %367 = vst.msk [vmem:[#allocation2 + $0x12] sm:$0x1] %vm268, %v346
        %368 = vst.msk [vmem:[#allocation2 + $0x1a] sm:$0x1] %vm268, %v348
        %369 = vst.msk [vmem:[#allocation2 + $0x22] sm:$0x1] %vm268, %v350
        %370 = vst.msk [vmem:[#allocation2 + $0x2a] sm:$0x1] %vm268, %v352
        %371 = vst.msk [vmem:[#allocation2 + $0x32] sm:$0x1] %vm268, %v354
        %372 = vst.msk [vmem:[#allocation2 + $0x3a] sm:$0x1] %vm268, %v356
        %373 = vrot.lane.b32.xlu0 %v280, 116
        %v374 = vpop.permute.xlu0 %373
        %375 = vrot.lane.b32.xlu0 %v284, 116
        %v376 = vpop.permute.xlu0 %375
        %377 = vrot.lane.b32.xlu0 %v288, 116
        %v378 = vpop.permute.xlu0 %377
        %379 = vrot.lane.b32.xlu0 %v292, 116
        %v380 = vpop.permute.xlu0 %379
        %381 = vrot.lane.b32.xlu0 %v296, 116
        %v382 = vpop.permute.xlu0 %381
        %383 = vrot.lane.b32.xlu0 %v300, 116
        %v384 = vpop.permute.xlu0 %383
        %385 = vrot.lane.b32.xlu0 %v304, 116
        %v386 = vpop.permute.xlu0 %385
        %387 = vrot.lane.b32.xlu0 %v308, 116
        %v388 = vpop.permute.xlu0 %387
        %397 = vst.msk [vmem:[#allocation2 + $0x3] sm:$0x1] %vm268, %v374
        %398 = vst.msk [vmem:[#allocation2 + $0xb] sm:$0x1] %vm268, %v376
        %399 = vst.msk [vmem:[#allocation2 + $0x13] sm:$0x1] %vm268, %v378
        %400 = vst.msk [vmem:[#allocation2 + $0x1b] sm:$0x1] %vm268, %v380
        %401 = vst.msk [vmem:[#allocation2 + $0x23] sm:$0x1] %vm268, %v382
        %402 = vst.msk [vmem:[#allocation2 + $0x2b] sm:$0x1] %vm268, %v384
        %403 = vst.msk [vmem:[#allocation2 + $0x33] sm:$0x1] %vm268, %v386
        %404 = vst.msk [vmem:[#allocation2 + $0x3b] sm:$0x1] %vm268, %v388
        %405 = vrot.lane.b32.xlu0 %v280, 112
        %v406 = vpop.permute.xlu0 %405
        %407 = vrot.lane.b32.xlu0 %v284, 112
        %v408 = vpop.permute.xlu0 %407
        %409 = vrot.lane.b32.xlu0 %v288, 112
        %v410 = vpop.permute.xlu0 %409
        %411 = vrot.lane.b32.xlu0 %v292, 112
        %v412 = vpop.permute.xlu0 %411
        %413 = vrot.lane.b32.xlu0 %v296, 112
        %v414 = vpop.permute.xlu0 %413
        %415 = vrot.lane.b32.xlu0 %v300, 112
        %v416 = vpop.permute.xlu0 %415
        %417 = vrot.lane.b32.xlu0 %v304, 112
        %v418 = vpop.permute.xlu0 %417
        %419 = vrot.lane.b32.xlu0 %v308, 112
        %v420 = vpop.permute.xlu0 %419
        %429 = vst.msk [vmem:[#allocation2 + $0x4] sm:$0x1] %vm268, %v406
        %430 = vst.msk [vmem:[#allocation2 + $0xc] sm:$0x1] %vm268, %v408
        %431 = vst.msk [vmem:[#allocation2 + $0x14] sm:$0x1] %vm268, %v410
        %432 = vst.msk [vmem:[#allocation2 + $0x1c] sm:$0x1] %vm268, %v412
        %433 = vst.msk [vmem:[#allocation2 + $0x24] sm:$0x1] %vm268, %v414
        %434 = vst.msk [vmem:[#allocation2 + $0x2c] sm:$0x1] %vm268, %v416
        %435 = vst.msk [vmem:[#allocation2 + $0x34] sm:$0x1] %vm268, %v418
        %436 = vst.msk [vmem:[#allocation2 + $0x3c] sm:$0x1] %vm268, %v420
        %437 = vrot.lane.b32.xlu0 %v280, 108
        %v438 = vpop.permute.xlu0 %437
        %439 = vrot.lane.b32.xlu0 %v284, 108
        %v440 = vpop.permute.xlu0 %439
        %441 = vrot.lane.b32.xlu0 %v288, 108
        %v442 = vpop.permute.xlu0 %441
        %443 = vrot.lane.b32.xlu0 %v292, 108
        %v444 = vpop.permute.xlu0 %443
        %445 = vrot.lane.b32.xlu0 %v296, 108
        %v446 = vpop.permute.xlu0 %445
        %447 = vrot.lane.b32.xlu0 %v300, 108
        %v448 = vpop.permute.xlu0 %447
        %449 = vrot.lane.b32.xlu0 %v304, 108
        %v450 = vpop.permute.xlu0 %449
        %451 = vrot.lane.b32.xlu0 %v308, 108
        %v452 = vpop.permute.xlu0 %451
        %461 = vst.msk [vmem:[#allocation2 + $0x5] sm:$0x1] %vm268, %v438
        %462 = vst.msk [vmem:[#allocation2 + $0xd] sm:$0x1] %vm268, %v440
        %463 = vst.msk [vmem:[#allocation2 + $0x15] sm:$0x1] %vm268, %v442
        %464 = vst.msk [vmem:[#allocation2 + $0x1d] sm:$0x1] %vm268, %v444
        %465 = vst.msk [vmem:[#allocation2 + $0x25] sm:$0x1] %vm268, %v446
        %466 = vst.msk [vmem:[#allocation2 + $0x2d] sm:$0x1] %vm268, %v448
        %467 = vst.msk [vmem:[#allocation2 + $0x35] sm:$0x1] %vm268, %v450
        %468 = vst.msk [vmem:[#allocation2 + $0x3d] sm:$0x1] %vm268, %v452
        %469 = vrot.lane.b32.xlu0 %v280, 104
        %v470 = vpop.permute.xlu0 %469
        %471 = vrot.lane.b32.xlu0 %v284, 104
        %v472 = vpop.permute.xlu0 %471
        %473 = vrot.lane.b32.xlu0 %v288, 104
        %v474 = vpop.permute.xlu0 %473
        %475 = vrot.lane.b32.xlu0 %v292, 104
        %v476 = vpop.permute.xlu0 %475
        %477 = vrot.lane.b32.xlu0 %v296, 104
        %v478 = vpop.permute.xlu0 %477
        %479 = vrot.lane.b32.xlu0 %v300, 104
        %v480 = vpop.permute.xlu0 %479
        %481 = vrot.lane.b32.xlu0 %v304, 104
        %v482 = vpop.permute.xlu0 %481
        %483 = vrot.lane.b32.xlu0 %v308, 104
        %v484 = vpop.permute.xlu0 %483
        %493 = vst.msk [vmem:[#allocation2 + $0x6] sm:$0x1] %vm268, %v470
        %494 = vst.msk [vmem:[#allocation2 + $0xe] sm:$0x1] %vm268, %v472
        %495 = vst.msk [vmem:[#allocation2 + $0x16] sm:$0x1] %vm268, %v474
        %496 = vst.msk [vmem:[#allocation2 + $0x1e] sm:$0x1] %vm268, %v476
        %497 = vst.msk [vmem:[#allocation2 + $0x26] sm:$0x1] %vm268, %v478
        %498 = vst.msk [vmem:[#allocation2 + $0x2e] sm:$0x1] %vm268, %v480
        %499 = vst.msk [vmem:[#allocation2 + $0x36] sm:$0x1] %vm268, %v482
        %500 = vst.msk [vmem:[#allocation2 + $0x3e] sm:$0x1] %vm268, %v484
        %501 = vrot.lane.b32.xlu0 %v280, 100
        %v502 = vpop.permute.xlu0 %501
        %503 = vrot.lane.b32.xlu0 %v284, 100
        %v504 = vpop.permute.xlu0 %503
        %505 = vrot.lane.b32.xlu0 %v288, 100
        %v506 = vpop.permute.xlu0 %505
        %507 = vrot.lane.b32.xlu0 %v292, 100
        %v508 = vpop.permute.xlu0 %507
        %509 = vrot.lane.b32.xlu0 %v296, 100
        %v510 = vpop.permute.xlu0 %509
        %511 = vrot.lane.b32.xlu0 %v300, 100
        %v512 = vpop.permute.xlu0 %511
        %513 = vrot.lane.b32.xlu0 %v304, 100
        %v514 = vpop.permute.xlu0 %513
        %515 = vrot.lane.b32.xlu0 %v308, 100
        %v516 = vpop.permute.xlu0 %515
        %525 = vst.msk [vmem:[#allocation2 + $0x7] sm:$0x1] %vm268, %v502
        %526 = vst.msk [vmem:[#allocation2 + $0xf] sm:$0x1] %vm268, %v504
        %527 = vst.msk [vmem:[#allocation2 + $0x17] sm:$0x1] %vm268, %v506
        %528 = vst.msk [vmem:[#allocation2 + $0x1f] sm:$0x1] %vm268, %v508
        %529 = vst.msk [vmem:[#allocation2 + $0x27] sm:$0x1] %vm268, %v510
        %530 = vst.msk [vmem:[#allocation2 + $0x2f] sm:$0x1] %vm268, %v512
        %531 = vst.msk [vmem:[#allocation2 + $0x37] sm:$0x1] %vm268, %v514
        %532 = vst.msk [vmem:[#allocation2 + $0x3f] sm:$0x1] %vm268, %v516
        %vm533 = vcmask 293888
        %534 = vst.msk [vmem:[#allocation3] sm:$0xff] %vm533, 0.0
        %535 = vst.msk [vmem:[#allocation3 + $0x8] sm:$0xff] %vm533, 0.0
        %536 = vst.msk [vmem:[#allocation3 + $0x10] sm:$0xff] %vm533, 0.0
        %537 = vst.msk [vmem:[#allocation3 + $0x18] sm:$0xff] %vm533, 0.0
        %538 = vst.msk [vmem:[#allocation3 + $0x20] sm:$0xff] %vm533, 0.0
        %539 = vst.msk [vmem:[#allocation3 + $0x28] sm:$0xff] %vm533, 0.0
        %540 = vst.msk [vmem:[#allocation3 + $0x30] sm:$0xff] %vm533, 0.0
        %541 = vst.msk [vmem:[#allocation3 + $0x38] sm:$0xff] %vm533, 0.0
        %v542 = vld [vmem:[#allocation2] sm:$0x7f]
        %v543 = vld [vmem:[#allocation2 + $0x8] sm:$0x7f]
        %v544 = vld [vmem:[#allocation2 + $0x10] sm:$0x7f]
        %v545 = vld [vmem:[#allocation2 + $0x18] sm:$0x7f]
        %v546 = vld [vmem:[#allocation2 + $0x20] sm:$0x7f]
        %v547 = vld [vmem:[#allocation2 + $0x28] sm:$0x7f]
        %v548 = vld [vmem:[#allocation2 + $0x30] sm:$0x7f]
        %s549 = scalar_lea.vmem [#allocation3], 8
        %vm550 = vcmask 30720
        %551 = vst.msk [vmem:[%s549 + $0x1] sm:$0x7f] %vm550, %v542
        %552 = vst.msk [vmem:[%s549 + $0x9] sm:$0x7f] %vm550, %v543
        %553 = vst.msk [vmem:[%s549 + $0x11] sm:$0x7f] %vm550, %v544
        %554 = vst.msk [vmem:[%s549 + $0x19] sm:$0x7f] %vm550, %v545
        %555 = vst.msk [vmem:[%s549 + $0x21] sm:$0x7f] %vm550, %v546
        %556 = vst.msk [vmem:[%s549 + $0x29] sm:$0x7f] %vm550, %v547
        %557 = vst.msk [vmem:[%s549 + $0x31] sm:$0x7f] %vm550, %v548
        %v558 = vld [vmem:[#allocation2] sm:$0xff]
        %v559 = vld [vmem:[#allocation2 + $0x8] sm:$0xff]
        %v560 = vld [vmem:[#allocation2 + $0x10] sm:$0xff]
        %v561 = vld [vmem:[#allocation2 + $0x18] sm:$0xff]
        %v562 = vld [vmem:[#allocation2 + $0x20] sm:$0xff]
        %v563 = vld [vmem:[#allocation2 + $0x28] sm:$0xff]
        %v564 = vld [vmem:[#allocation2 + $0x30] sm:$0xff]
        %572 = vrot.lane.b32.xlu0 %v558, 4
        %v573 = vpop.permute.xlu0 %572
        %574 = vrot.lane.b32.xlu0 %v559, 4
        %v575 = vpop.permute.xlu0 %574
        %576 = vrot.lane.b32.xlu0 %v560, 4
        %v577 = vpop.permute.xlu0 %576
        %578 = vrot.lane.b32.xlu0 %v561, 4
        %v579 = vpop.permute.xlu0 %578
        %580 = vrot.lane.b32.xlu0 %v562, 4
        %v581 = vpop.permute.xlu0 %580
        %582 = vrot.lane.b32.xlu0 %v563, 4
        %v583 = vpop.permute.xlu0 %582
        %584 = vrot.lane.b32.xlu0 %v564, 4
        %v585 = vpop.permute.xlu0 %584
        %vm593 = vcmask 64544
        %594 = vst.msk [vmem:[%s549] sm:$0xff] %vm593, %v573
        %595 = vst.msk [vmem:[%s549 + $0x8] sm:$0xff] %vm593, %v575
        %596 = vst.msk [vmem:[%s549 + $0x10] sm:$0xff] %vm593, %v577
        %597 = vst.msk [vmem:[%s549 + $0x18] sm:$0xff] %vm593, %v579
        %598 = vst.msk [vmem:[%s549 + $0x20] sm:$0xff] %vm593, %v581
        %599 = vst.msk [vmem:[%s549 + $0x28] sm:$0xff] %vm593, %v583
        %600 = vst.msk [vmem:[%s549 + $0x30] sm:$0xff] %vm593, %v585
        %v601 = vld [vmem:[#allocation2 + $0x1] sm:$0x7f]
        %v602 = vld [vmem:[#allocation2 + $0x9] sm:$0x7f]
        %v603 = vld [vmem:[#allocation2 + $0x11] sm:$0x7f]
        %v604 = vld [vmem:[#allocation2 + $0x19] sm:$0x7f]
        %v605 = vld [vmem:[#allocation2 + $0x21] sm:$0x7f]
        %v606 = vld [vmem:[#allocation2 + $0x29] sm:$0x7f]
        %v607 = vld [vmem:[#allocation2 + $0x31] sm:$0x7f]
        %615 = vrot.lane.b32.xlu0 %v601, 8
        %v616 = vpop.permute.xlu0 %615
        %617 = vrot.lane.b32.xlu0 %v602, 8
        %v618 = vpop.permute.xlu0 %617
        %619 = vrot.lane.b32.xlu0 %v603, 8
        %v620 = vpop.permute.xlu0 %619
        %621 = vrot.lane.b32.xlu0 %v604, 8
        %v622 = vpop.permute.xlu0 %621
        %623 = vrot.lane.b32.xlu0 %v605, 8
        %v624 = vpop.permute.xlu0 %623
        %625 = vrot.lane.b32.xlu0 %v606, 8
        %v626 = vpop.permute.xlu0 %625
        %627 = vrot.lane.b32.xlu0 %v607, 8
        %v628 = vpop.permute.xlu0 %627
        %vm636 = vcmask 96320
        %637 = vst.msk [vmem:[%s549] sm:$0x7f] %vm636, %v616
        %638 = vst.msk [vmem:[%s549 + $0x8] sm:$0x7f] %vm636, %v618
        %639 = vst.msk [vmem:[%s549 + $0x10] sm:$0x7f] %vm636, %v620
        %640 = vst.msk [vmem:[%s549 + $0x18] sm:$0x7f] %vm636, %v622
        %641 = vst.msk [vmem:[%s549 + $0x20] sm:$0x7f] %vm636, %v624
        %642 = vst.msk [vmem:[%s549 + $0x28] sm:$0x7f] %vm636, %v626
        %643 = vst.msk [vmem:[%s549 + $0x30] sm:$0x7f] %vm636, %v628
        %v644 = vld [vmem:[#allocation2] sm:$0x7f]
        %v645 = vld [vmem:[#allocation2 + $0x8] sm:$0x7f]
        %v646 = vld [vmem:[#allocation2 + $0x10] sm:$0x7f]
        %v647 = vld [vmem:[#allocation2 + $0x18] sm:$0x7f]
        %v648 = vld [vmem:[#allocation2 + $0x20] sm:$0x7f]
        %v649 = vld [vmem:[#allocation2 + $0x28] sm:$0x7f]
        %v650 = vld [vmem:[#allocation2 + $0x30] sm:$0x7f]
        %v651 = vld [vmem:[#allocation2 + $0x38] sm:$0x7f]
        %660 = vrot.lane.b32.xlu0 %v644, 12
        %v661 = vpop.permute.xlu0 %660
        %662 = vrot.lane.b32.xlu0 %v645, 12
        %v663 = vpop.permute.xlu0 %662
        %664 = vrot.lane.b32.xlu0 %v646, 12
        %v665 = vpop.permute.xlu0 %664
        %666 = vrot.lane.b32.xlu0 %v647, 12
        %v667 = vpop.permute.xlu0 %666
        %668 = vrot.lane.b32.xlu0 %v648, 12
        %v669 = vpop.permute.xlu0 %668
        %670 = vrot.lane.b32.xlu0 %v649, 12
        %v671 = vpop.permute.xlu0 %670
        %672 = vrot.lane.b32.xlu0 %v650, 12
        %v673 = vpop.permute.xlu0 %672
        %674 = vrot.lane.b32.xlu0 %v651, 12
        %v675 = vpop.permute.xlu0 %674
        %vm684 = vcmask 129120
        %685 = vst.msk [vmem:[#allocation3 + $0x1] sm:$0x7f] %vm684, %v661
        %686 = vst.msk [vmem:[#allocation3 + $0x9] sm:$0x7f] %vm684, %v663
        %687 = vst.msk [vmem:[#allocation3 + $0x11] sm:$0x7f] %vm684, %v665
        %688 = vst.msk [vmem:[#allocation3 + $0x19] sm:$0x7f] %vm684, %v667
        %689 = vst.msk [vmem:[#allocation3 + $0x21] sm:$0x7f] %vm684, %v669
        %690 = vst.msk [vmem:[#allocation3 + $0x29] sm:$0x7f] %vm684, %v671
        %691 = vst.msk [vmem:[#allocation3 + $0x31] sm:$0x7f] %vm684, %v673
        %692 = vst.msk [vmem:[#allocation3 + $0x39] sm:$0x7f] %vm684, %v675
        %v693 = vld [vmem:[#allocation2] sm:$0xff]
        %v694 = vld [vmem:[#allocation2 + $0x8] sm:$0xff]
        %v695 = vld [vmem:[#allocation2 + $0x10] sm:$0xff]
        %v696 = vld [vmem:[#allocation2 + $0x18] sm:$0xff]
        %v697 = vld [vmem:[#allocation2 + $0x20] sm:$0xff]
        %v698 = vld [vmem:[#allocation2 + $0x28] sm:$0xff]
        %v699 = vld [vmem:[#allocation2 + $0x30] sm:$0xff]
        %v700 = vld [vmem:[#allocation2 + $0x38] sm:$0xff]
        %709 = vrot.lane.b32.xlu0 %v693, 16
        %v710 = vpop.permute.xlu0 %709
        %711 = vrot.lane.b32.xlu0 %v694, 16
        %v712 = vpop.permute.xlu0 %711
        %713 = vrot.lane.b32.xlu0 %v695, 16
        %v714 = vpop.permute.xlu0 %713
        %715 = vrot.lane.b32.xlu0 %v696, 16
        %v716 = vpop.permute.xlu0 %715
        %717 = vrot.lane.b32.xlu0 %v697, 16
        %v718 = vpop.permute.xlu0 %717
        %719 = vrot.lane.b32.xlu0 %v698, 16
        %v720 = vpop.permute.xlu0 %719
        %721 = vrot.lane.b32.xlu0 %v699, 16
        %v722 = vpop.permute.xlu0 %721
        %723 = vrot.lane.b32.xlu0 %v700, 16
        %v724 = vpop.permute.xlu0 %723
        %vm733 = vcmask 162944
        %734 = vst.msk [vmem:[#allocation3] sm:$0xff] %vm733, %v710
        %735 = vst.msk [vmem:[#allocation3 + $0x8] sm:$0xff] %vm733, %v712
        %736 = vst.msk [vmem:[#allocation3 + $0x10] sm:$0xff] %vm733, %v714
        %737 = vst.msk [vmem:[#allocation3 + $0x18] sm:$0xff] %vm733, %v716
        %738 = vst.msk [vmem:[#allocation3 + $0x20] sm:$0xff] %vm733, %v718
        %739 = vst.msk [vmem:[#allocation3 + $0x28] sm:$0xff] %vm733, %v720
        %740 = vst.msk [vmem:[#allocation3 + $0x30] sm:$0xff] %vm733, %v722
        %741 = vst.msk [vmem:[#allocation3 + $0x38] sm:$0xff] %vm733, %v724
        %v742 = vld [vmem:[#allocation2 + $0x1] sm:$0x7f]
        %v743 = vld [vmem:[#allocation2 + $0x9] sm:$0x7f]
        %v744 = vld [vmem:[#allocation2 + $0x11] sm:$0x7f]
        %v745 = vld [vmem:[#allocation2 + $0x19] sm:$0x7f]
        %v746 = vld [vmem:[#allocation2 + $0x21] sm:$0x7f]
        %v747 = vld [vmem:[#allocation2 + $0x29] sm:$0x7f]
        %v748 = vld [vmem:[#allocation2 + $0x31] sm:$0x7f]
        %v749 = vld [vmem:[#allocation2 + $0x39] sm:$0x7f]
        %758 = vrot.lane.b32.xlu0 %v742, 20
        %v759 = vpop.permute.xlu0 %758
        %760 = vrot.lane.b32.xlu0 %v743, 20
        %v761 = vpop.permute.xlu0 %760
        %762 = vrot.lane.b32.xlu0 %v744, 20
        %v763 = vpop.permute.xlu0 %762
        %764 = vrot.lane.b32.xlu0 %v745, 20
        %v765 = vpop.permute.xlu0 %764
        %766 = vrot.lane.b32.xlu0 %v746, 20
        %v767 = vpop.permute.xlu0 %766
        %768 = vrot.lane.b32.xlu0 %v747, 20
        %v769 = vpop.permute.xlu0 %768
        %770 = vrot.lane.b32.xlu0 %v748, 20
        %v771 = vpop.permute.xlu0 %770
        %772 = vrot.lane.b32.xlu0 %v749, 20
        %v773 = vpop.permute.xlu0 %772
        %vm782 = vcmask 194720
        %783 = vst.msk [vmem:[#allocation3] sm:$0x7f] %vm782, %v759
        %784 = vst.msk [vmem:[#allocation3 + $0x8] sm:$0x7f] %vm782, %v761
        %785 = vst.msk [vmem:[#allocation3 + $0x10] sm:$0x7f] %vm782, %v763
        %786 = vst.msk [vmem:[#allocation3 + $0x18] sm:$0x7f] %vm782, %v765
        %787 = vst.msk [vmem:[#allocation3 + $0x20] sm:$0x7f] %vm782, %v767
        %788 = vst.msk [vmem:[#allocation3 + $0x28] sm:$0x7f] %vm782, %v769
        %789 = vst.msk [vmem:[#allocation3 + $0x30] sm:$0x7f] %vm782, %v771
        %790 = vst.msk [vmem:[#allocation3 + $0x38] sm:$0x7f] %vm782, %v773
        %s791 = scalar_lea.vmem [#allocation2], 8
        %v792 = vld [vmem:[%s791] sm:$0x7f]
        %v793 = vld [vmem:[%s791 + $0x8] sm:$0x7f]
        %v794 = vld [vmem:[%s791 + $0x10] sm:$0x7f]
        %v795 = vld [vmem:[%s791 + $0x18] sm:$0x7f]
        %v796 = vld [vmem:[%s791 + $0x20] sm:$0x7f]
        %v797 = vld [vmem:[%s791 + $0x28] sm:$0x7f]
        %v798 = vld [vmem:[%s791 + $0x30] sm:$0x7f]
        %806 = vrot.lane.b32.xlu0 %v792, 24
        %v807 = vpop.permute.xlu0 %806
        %808 = vrot.lane.b32.xlu0 %v793, 24
        %v809 = vpop.permute.xlu0 %808
        %810 = vrot.lane.b32.xlu0 %v794, 24
        %v811 = vpop.permute.xlu0 %810
        %812 = vrot.lane.b32.xlu0 %v795, 24
        %v813 = vpop.permute.xlu0 %812
        %814 = vrot.lane.b32.xlu0 %v796, 24
        %v815 = vpop.permute.xlu0 %814
        %816 = vrot.lane.b32.xlu0 %v797, 24
        %v817 = vpop.permute.xlu0 %816
        %818 = vrot.lane.b32.xlu0 %v798, 24
        %v819 = vpop.permute.xlu0 %818
        %vm827 = vcmask 227520
        %828 = vst.msk [vmem:[#allocation3 + $0x1] sm:$0x7f] %vm827, %v807
        %829 = vst.msk [vmem:[#allocation3 + $0x9] sm:$0x7f] %vm827, %v809
        %830 = vst.msk [vmem:[#allocation3 + $0x11] sm:$0x7f] %vm827, %v811
        %831 = vst.msk [vmem:[#allocation3 + $0x19] sm:$0x7f] %vm827, %v813
        %832 = vst.msk [vmem:[#allocation3 + $0x21] sm:$0x7f] %vm827, %v815
        %833 = vst.msk [vmem:[#allocation3 + $0x29] sm:$0x7f] %vm827, %v817
        %834 = vst.msk [vmem:[#allocation3 + $0x31] sm:$0x7f] %vm827, %v819
        %v835 = vld [vmem:[%s791] sm:$0xff]
        %v836 = vld [vmem:[%s791 + $0x8] sm:$0xff]
        %v837 = vld [vmem:[%s791 + $0x10] sm:$0xff]
        %v838 = vld [vmem:[%s791 + $0x18] sm:$0xff]
        %v839 = vld [vmem:[%s791 + $0x20] sm:$0xff]
        %v840 = vld [vmem:[%s791 + $0x28] sm:$0xff]
        %v841 = vld [vmem:[%s791 + $0x30] sm:$0xff]
        %849 = vrot.lane.b32.xlu0 %v835, 28
        %v850 = vpop.permute.xlu0 %849
        %851 = vrot.lane.b32.xlu0 %v836, 28
        %v852 = vpop.permute.xlu0 %851
        %853 = vrot.lane.b32.xlu0 %v837, 28
        %v854 = vpop.permute.xlu0 %853
        %855 = vrot.lane.b32.xlu0 %v838, 28
        %v856 = vpop.permute.xlu0 %855
        %857 = vrot.lane.b32.xlu0 %v839, 28
        %v858 = vpop.permute.xlu0 %857
        %859 = vrot.lane.b32.xlu0 %v840, 28
        %v860 = vpop.permute.xlu0 %859
        %861 = vrot.lane.b32.xlu0 %v841, 28
        %v862 = vpop.permute.xlu0 %861
        %vm870 = vcmask 261344
        %871 = vst.msk [vmem:[#allocation3] sm:$0xff] %vm870, %v850
        %872 = vst.msk [vmem:[#allocation3 + $0x8] sm:$0xff] %vm870, %v852
        %873 = vst.msk [vmem:[#allocation3 + $0x10] sm:$0xff] %vm870, %v854
        %874 = vst.msk [vmem:[#allocation3 + $0x18] sm:$0xff] %vm870, %v856
        %875 = vst.msk [vmem:[#allocation3 + $0x20] sm:$0xff] %vm870, %v858
        %876 = vst.msk [vmem:[#allocation3 + $0x28] sm:$0xff] %vm870, %v860
        %877 = vst.msk [vmem:[#allocation3 + $0x30] sm:$0xff] %vm870, %v862
        %v878 = vld [vmem:[%s791 + $0x1] sm:$0x7f]
        %v879 = vld [vmem:[%s791 + $0x9] sm:$0x7f]
        %v880 = vld [vmem:[%s791 + $0x11] sm:$0x7f]
        %v881 = vld [vmem:[%s791 + $0x19] sm:$0x7f]
        %v882 = vld [vmem:[%s791 + $0x21] sm:$0x7f]
        %v883 = vld [vmem:[%s791 + $0x29] sm:$0x7f]
        %v884 = vld [vmem:[%s791 + $0x31] sm:$0x7f]
        %892 = vrot.lane.b32.xlu0 %v878, 32
        %v893 = vpop.permute.xlu0 %892
        %894 = vrot.lane.b32.xlu0 %v879, 32
        %v895 = vpop.permute.xlu0 %894
        %896 = vrot.lane.b32.xlu0 %v880, 32
        %v897 = vpop.permute.xlu0 %896
        %898 = vrot.lane.b32.xlu0 %v881, 32
        %v899 = vpop.permute.xlu0 %898
        %900 = vrot.lane.b32.xlu0 %v882, 32
        %v901 = vpop.permute.xlu0 %900
        %902 = vrot.lane.b32.xlu0 %v883, 32
        %v903 = vpop.permute.xlu0 %902
        %904 = vrot.lane.b32.xlu0 %v884, 32
        %v905 = vpop.permute.xlu0 %904
        %vm913 = vcmask 293120
        %914 = vst.msk [vmem:[#allocation3] sm:$0x7f] %vm913, %v893
        %915 = vst.msk [vmem:[#allocation3 + $0x8] sm:$0x7f] %vm913, %v895
        %916 = vst.msk [vmem:[#allocation3 + $0x10] sm:$0x7f] %vm913, %v897
        %917 = vst.msk [vmem:[#allocation3 + $0x18] sm:$0x7f] %vm913, %v899
        %918 = vst.msk [vmem:[#allocation3 + $0x20] sm:$0x7f] %vm913, %v901
        %919 = vst.msk [vmem:[#allocation3 + $0x28] sm:$0x7f] %vm913, %v903
        %920 = vst.msk [vmem:[#allocation3 + $0x30] sm:$0x7f] %vm913, %v905
        %v921 = vld [vmem:[#allocation3] sm:$0xff]
        %v922 = vld [vmem:[#allocation3 + $0x8] sm:$0xff]
        %v923 = vld [vmem:[#allocation3 + $0x10] sm:$0xff]
        %v924 = vld [vmem:[#allocation3 + $0x18] sm:$0xff]
        %v925 = vld [vmem:[#allocation3 + $0x20] sm:$0xff]
        %v926 = vld [vmem:[#allocation3 + $0x28] sm:$0xff]
        %v927 = vld [vmem:[#allocation3 + $0x30] sm:$0xff]
        %v928 = vld [vmem:[#allocation3 + $0x38] sm:$0xff]
        %v929 = vld [vmem:[%s1] sm:$0xff]
        %v930 = vld [vmem:[%s1 + $0x8] sm:$0xff]
        %v931 = vld [vmem:[%s1 + $0x10] sm:$0xff]
        %v932 = vld [vmem:[%s1 + $0x18] sm:$0xff]
        %v933 = vld [vmem:[%s1 + $0x20] sm:$0xf]
        %v935 = vsel %vm533, %v921, 0
        %v938 = vsel %vm533, %v922, 0
        %v941 = vsel %vm533, %v923, 0
        %v944 = vsel %vm533, %v924, 0
        %v947 = vsel %vm533, %v925, 0
        %v950 = vsel %vm533, %v926, 0
        %v953 = vsel %vm533, %v927, 0
        %v956 = vsel %vm533, %v928, 0
        %vm958 = vcmask 1043456
        %v960 = vsel %vm958, %v933, 0
        %962 = vmatprep.subr.mxu0 0.0
        %963 = vmatpush1.msra.mxu0 %v929
        %964 = vmatprep.subr.mxu0 0.0
        %965 = vmatpush1.msra.mxu0 %v930
        %966 = vmatprep.subr.mxu0 0.0
        %967 = vmatpush1.msra.mxu0 %v931
        %968 = vmatprep.subr.mxu0 0.0
        %969 = vmatpush1.msra.mxu0 %v932
        %970 = vmatprep.subr.mxu0 0.0
        %971 = vmatpush1.msra.mxu0 %v960
        %972 = vmatprep.subr.mxu0 0.0
        %973 = vmatpush1.msra.mxu0 0.0
        %974 = vmatprep.subr.mxu0 0.0
        %975 = vmatpush1.msra.mxu0 0.0
        %976 = vmatprep.subr.mxu0 0.0
        %977 = vmatpush1.msra.mxu0 0.0
        %978 = vmatprep.subr.mxu0 0.0
        %979 = vmatpush1.msra.mxu0 0.0
        %980 = vmatprep.subr.mxu0 0.0
        %981 = vmatpush1.msra.mxu0 0.0
        %982 = vmatprep.subr.mxu0 0.0
        %983 = vmatpush1.msra.mxu0 0.0
        %984 = vmatprep.subr.mxu0 0.0
        %985 = vmatpush1.msra.mxu0 0.0
        %986 = vmatprep.subr.mxu0 0.0
        %987 = vmatpush1.msra.mxu0 0.0
        %988 = vmatprep.subr.mxu0 0.0
        %989 = vmatpush1.msra.mxu0 0.0
        %990 = vmatprep.subr.mxu0 0.0
        %991 = vmatpush1.msra.mxu0 0.0
        %992 = vmatprep.subr.mxu0 0.0
        %993 = vmatpush1.msra.mxu0 0.0
        %994 = vmatprep.subr.mxu0 0.0
        %995 = vmatpush1.msra.mxu0 0.0
        %996 = vmatprep.subr.mxu0 0.0
        %997 = vmatpush1.msra.mxu0 0.0
        %998 = vmatprep.subr.mxu0 0.0
        %999 = vmatpush1.msra.mxu0 0.0
        %1000 = vmatprep.subr.mxu0 0.0
        %1001 = vmatpush1.msra.mxu0 0.0
        %1002 = vmatprep.subr.mxu0 0.0
        %1003 = vmatpush1.msra.mxu0 0.0
        %1004 = vmatprep.subr.mxu0 0.0
        %1005 = vmatpush1.msra.mxu0 0.0
        %1006 = vmatprep.subr.mxu0 0.0
        %1007 = vmatpush1.msra.mxu0 0.0
        %1008 = vmatprep.subr.mxu0 0.0
        %1009 = vmatpush1.msra.mxu0 0.0
        %1010 = vmatprep.subr.mxu0 0.0
        %1011 = vmatpush1.msra.mxu0 0.0
        %1012 = vmatprep.subr.mxu0 0.0
        %1013 = vmatpush1.msra.mxu0 0.0
        %1014 = vmatprep.subr.mxu0 0.0
        %1015 = vmatpush1.msra.mxu0 0.0
        %1016 = vmatprep.subr.mxu0 0.0
        %1017 = vmatpush1.msra.mxu0 0.0
        %1018 = vmatprep.subr.mxu0 0.0
        %1019 = vmatpush1.msra.mxu0 0.0
        %1020 = vmatprep.subr.mxu0 0.0
        %1021 = vmatpush1.msra.mxu0 0.0
        %1022 = vmatprep.subr.mxu0 0.0
        %1023 = vmatpush1.msra.mxu0 0.0
        %1024 = vmatprep.subr.mxu0 0.0
        %1025 = vmatpush1.msra.mxu0 0.0
        %1026 = vmatprep.mubr.f32.mxu0 0.0
        %1027 = vmatmul.mubr.f32.gmra.mrb[0].mxu0 %v935
        %v1028 = vpop.f32.mrb[0].mxu0
        %v1029 = vadd.f32 0.0, %v1028
        %v1030 = vpop.f32.mrb[0].mxu0
        %1031 = vmatprep.mubr.f32.mxu0 0.0
        %1032 = vmatmul.mubr.f32.gmra.mrb[0].mxu0 %v938
        %v1033 = vpop.f32.mrb[0].mxu0
        %v1034 = vadd.f32 0.0, %v1033
        %v1035 = vpop.f32.mrb[0].mxu0
        %1036 = vmatprep.mubr.f32.mxu0 0.0
        %1037 = vmatmul.mubr.f32.gmra.mrb[0].mxu0 %v941
        %v1038 = vpop.f32.mrb[0].mxu0
        %v1039 = vadd.f32 0.0, %v1038
        %v1040 = vpop.f32.mrb[0].mxu0
        %1041 = vmatprep.mubr.f32.mxu0 0.0
        %1042 = vmatmul.mubr.f32.gmra.mrb[0].mxu0 %v944
        %v1043 = vpop.f32.mrb[0].mxu0
        %v1044 = vadd.f32 0.0, %v1043
        %v1045 = vpop.f32.mrb[0].mxu0
        %1046 = vmatprep.mubr.f32.mxu0 0.0
        %1047 = vmatmul.mubr.f32.gmra.mrb[0].mxu0 %v947
        %v1048 = vpop.f32.mrb[0].mxu0
        %v1049 = vadd.f32 0.0, %v1048
        %v1050 = vpop.f32.mrb[0].mxu0
        %1051 = vmatprep.mubr.f32.mxu0 0.0
        %1052 = vmatmul.mubr.f32.gmra.mrb[0].mxu0 %v950
        %v1053 = vpop.f32.mrb[0].mxu0
        %v1054 = vadd.f32 0.0, %v1053
        %v1055 = vpop.f32.mrb[0].mxu0
        %1056 = vmatprep.mubr.f32.mxu0 0.0
        %1057 = vmatmul.mubr.f32.gmra.mrb[0].mxu0 %v953
        %v1058 = vpop.f32.mrb[0].mxu0
        %v1059 = vadd.f32 0.0, %v1058
        %v1060 = vpop.f32.mrb[0].mxu0
        %1061 = vmatprep.mubr.f32.mxu0 0.0
        %1062 = vmatmul.mubr.f32.gmra.mrb[0].mxu0 %v956
        %v1063 = vpop.f32.mrb[0].mxu0
        %v1064 = vadd.f32 0.0, %v1063
        %v1065 = vpop.f32.mrb[0].mxu0
        %1066 = vdwg.mxu0
        %vm1067 = vcmask 64512
        %v1068 = vsel %vm1067, %v1029, 0.0
        %v1069 = vsel %vm1067, %v1034, 0.0
        %v1070 = vadd.f32 %v1068, %v1069
        %v1071 = vsel %vm1067, %v1039, 0.0
        %v1072 = vadd.f32 %v1070, %v1071
        %v1073 = vsel %vm1067, %v1044, 0.0
        %v1074 = vadd.f32 %v1072, %v1073
        %v1075 = vsel %vm1067, %v1049, 0.0
        %v1076 = vadd.f32 %v1074, %v1075
        %v1077 = vsel %vm1067, %v1054, 0.0
        %v1078 = vadd.f32 %v1076, %v1077
        %v1079 = vsel %vm1067, %v1059, 0.0
        %v1080 = vadd.f32 %v1078, %v1079
        %v1081 = vsel %vm1067, %v1064, 0.0
        %v1082 = vadd.f32 %v1080, %v1081
        %v1083 = vrot.slane %v1082, 4
        %v1084 = vadd.f32 %v1082, %v1083
        %v1085 = vrot.slane %v1084, 2
        %v1086 = vadd.f32 %v1084, %v1085
        %v1087 = vrot.slane %v1086, 1
        %v1088 = vadd.f32 %v1086, %v1087
        %v1089 = vmul.f32 %v1029, %v1029
        %v1090 = vmul.f32 %v1034, %v1034
        %v1091 = vmul.f32 %v1039, %v1039
        %v1092 = vmul.f32 %v1044, %v1044
        %v1093 = vmul.f32 %v1049, %v1049
        %v1094 = vmul.f32 %v1054, %v1054
        %v1095 = vmul.f32 %v1059, %v1059
        %v1096 = vmul.f32 %v1064, %v1064
        %v1097 = vsel %vm1067, %v1089, 0.0
        %v1098 = vsel %vm1067, %v1090, 0.0
        %v1099 = vadd.f32 %v1097, %v1098
        %v1100 = vsel %vm1067, %v1091, 0.0
        %v1101 = vadd.f32 %v1099, %v1100
        %v1102 = vsel %vm1067, %v1092, 0.0
        %v1103 = vadd.f32 %v1101, %v1102
        %v1104 = vsel %vm1067, %v1093, 0.0
        %v1105 = vadd.f32 %v1103, %v1104
        %v1106 = vsel %vm1067, %v1094, 0.0
        %v1107 = vadd.f32 %v1105, %v1106
        %v1108 = vsel %vm1067, %v1095, 0.0
        %v1109 = vadd.f32 %v1107, %v1108
        %v1110 = vsel %vm1067, %v1096, 0.0
        %v1111 = vadd.f32 %v1109, %v1110
        %v1112 = vrot.slane %v1111, 4
        %v1113 = vadd.f32 %v1111, %v1112
        %v1114 = vrot.slane %v1113, 2
        %v1115 = vadd.f32 %v1113, %v1114
        %v1116 = vrot.slane %v1115, 1
        %v1117 = vadd.f32 %v1115, %v1116
        %vm1118 = vcmask 1040384
        %v1119 = vsel %vm1118, %v1088, %v1117
        %vm1120 = vcmask 58368
        %1121 = vst.msk [vmem:[%s199] sm:$0x3] %vm1120, %v1119
        %v1130 = vrot.slane %v1034, 7
        %vm1131 = vcmask 1041409
        %v1132 = vsel %vm1131, %v1130, %v1029
        %v1133 = vrot.slane %v1039, 6
        %vm1134 = vcmask 1042434
        %v1135 = vsel %vm1134, %v1133, %v1132
        %v1136 = vrot.slane %v1044, 5
        %vm1137 = vcmask 1043459
        %v1138 = vsel %vm1137, %v1136, %v1135
        %v1139 = vrot.slane %v1049, 4
        %vm1140 = vcmask 1044484
        %v1141 = vsel %vm1140, %v1139, %v1138
        %v1142 = vrot.slane %v1054, 3
        %vm1143 = vcmask 1045509
        %v1144 = vsel %vm1143, %v1142, %v1141
        %v1145 = vrot.slane %v1059, 2
        %vm1146 = vcmask 1046534
        %v1147 = vsel %vm1146, %v1145, %v1144
        %v1148 = vrot.slane %v1064, 1
        %vm1149 = vcmask 1047559
        %v1150 = vsel %vm1149, %v1148, %v1147
        %v1152 = vrot.slane %v1029, 1
        %v1153 = vsel %vm1131, %v1034, %v1152
        %v1154 = vrot.slane %v1039, 7
        %v1155 = vsel %vm1134, %v1154, %v1153
        %v1156 = vrot.slane %v1044, 6
        %v1157 = vsel %vm1137, %v1156, %v1155
        %v1158 = vrot.slane %v1049, 5
        %v1159 = vsel %vm1140, %v1158, %v1157
        %v1160 = vrot.slane %v1054, 4
        %v1161 = vsel %vm1143, %v1160, %v1159
        %v1162 = vrot.slane %v1059, 3
        %v1163 = vsel %vm1146, %v1162, %v1161
        %v1164 = vrot.slane %v1064, 2
        %v1165 = vsel %vm1149, %v1164, %v1163
        %1166 = vrot.lane.b32.xlu0 %v1165, 8
        %v1167 = vpop.permute.xlu0 %1166
        %v1169 = vrot.slane %v1029, 2
        %v1170 = vrot.slane %v1034, 1
        %v1171 = vsel %vm1131, %v1170, %v1169
        %v1172 = vsel %vm1134, %v1039, %v1171
        %v1173 = vrot.slane %v1044, 7
        %v1174 = vsel %vm1137, %v1173, %v1172
        %v1175 = vrot.slane %v1049, 6
        %v1176 = vsel %vm1140, %v1175, %v1174
        %v1177 = vrot.slane %v1054, 5
        %v1178 = vsel %vm1143, %v1177, %v1176
        %v1179 = vrot.slane %v1059, 4
        %v1180 = vsel %vm1146, %v1179, %v1178
        %v1181 = vrot.slane %v1064, 3
        %v1182 = vsel %vm1149, %v1181, %v1180
        %1183 = vrot.lane.b32.xlu0 %v1182, 16
        %v1184 = vpop.permute.xlu0 %1183
        %v1186 = vrot.slane %v1029, 3
        %v1187 = vrot.slane %v1034, 2
        %v1188 = vsel %vm1131, %v1187, %v1186
        %v1189 = vrot.slane %v1039, 1
        %v1190 = vsel %vm1134, %v1189, %v1188
        %v1191 = vsel %vm1137, %v1044, %v1190
        %v1192 = vrot.slane %v1049, 7
        %v1193 = vsel %vm1140, %v1192, %v1191
        %v1194 = vrot.slane %v1054, 6
        %v1195 = vsel %vm1143, %v1194, %v1193
        %v1196 = vrot.slane %v1059, 5
        %v1197 = vsel %vm1146, %v1196, %v1195
        %v1198 = vrot.slane %v1064, 4
        %v1199 = vsel %vm1149, %v1198, %v1197
        %1200 = vrot.lane.b32.xlu0 %v1199, 24
        %v1201 = vpop.permute.xlu0 %1200
        %v1203 = vrot.slane %v1029, 4
        %v1204 = vrot.slane %v1034, 3
        %v1205 = vsel %vm1131, %v1204, %v1203
        %v1206 = vrot.slane %v1039, 2
        %v1207 = vsel %vm1134, %v1206, %v1205
        %v1208 = vrot.slane %v1044, 1
        %v1209 = vsel %vm1137, %v1208, %v1207
        %v1210 = vsel %vm1140, %v1049, %v1209
        %v1211 = vrot.slane %v1054, 7
        %v1212 = vsel %vm1143, %v1211, %v1210
        %v1213 = vrot.slane %v1059, 6
        %v1214 = vsel %vm1146, %v1213, %v1212
        %v1215 = vrot.slane %v1064, 5
        %v1216 = vsel %vm1149, %v1215, %v1214
        %1217 = vrot.lane.b32.xlu0 %v1216, 32
        %v1218 = vpop.permute.xlu0 %1217
        %v1220 = vrot.slane %v1029, 5
        %v1221 = vrot.slane %v1034, 4
        %v1222 = vsel %vm1131, %v1221, %v1220
        %v1223 = vrot.slane %v1039, 3
        %v1224 = vsel %vm1134, %v1223, %v1222
        %v1225 = vrot.slane %v1044, 2
        %v1226 = vsel %vm1137, %v1225, %v1224
        %v1227 = vrot.slane %v1049, 1
        %v1228 = vsel %vm1140, %v1227, %v1226
        %v1229 = vsel %vm1143, %v1054, %v1228
        %v1230 = vrot.slane %v1059, 7
        %v1231 = vsel %vm1146, %v1230, %v1229
        %v1232 = vrot.slane %v1064, 6
        %v1233 = vsel %vm1149, %v1232, %v1231
        %1234 = vrot.lane.b32.xlu0 %v1233, 40
        %v1235 = vpop.permute.xlu0 %1234
        %v1237 = vrot.slane %v1029, 6
        %v1238 = vrot.slane %v1034, 5
        %v1239 = vsel %vm1131, %v1238, %v1237
        %v1240 = vrot.slane %v1039, 4
        %v1241 = vsel %vm1134, %v1240, %v1239
        %v1242 = vrot.slane %v1044, 3
        %v1243 = vsel %vm1137, %v1242, %v1241
        %v1244 = vrot.slane %v1049, 2
        %v1245 = vsel %vm1140, %v1244, %v1243
        %v1246 = vrot.slane %v1054, 1
        %v1247 = vsel %vm1143, %v1246, %v1245
        %v1248 = vsel %vm1146, %v1059, %v1247
        %v1249 = vrot.slane %v1064, 7
        %v1250 = vsel %vm1149, %v1249, %v1248
        %1251 = vrot.lane.b32.xlu0 %v1250, 48
        %v1252 = vpop.permute.xlu0 %1251
        %v1254 = vrot.slane %v1029, 7
        %v1255 = vrot.slane %v1034, 6
        %v1256 = vsel %vm1131, %v1255, %v1254
        %v1257 = vrot.slane %v1039, 5
        %v1258 = vsel %vm1134, %v1257, %v1256
        %v1259 = vrot.slane %v1044, 4
        %v1260 = vsel %vm1137, %v1259, %v1258
        %v1261 = vrot.slane %v1049, 3
        %v1262 = vsel %vm1140, %v1261, %v1260
        %v1263 = vrot.slane %v1054, 2
        %v1264 = vsel %vm1143, %v1263, %v1262
        %v1265 = vrot.slane %v1059, 1
        %v1266 = vsel %vm1146, %v1265, %v1264
        %v1267 = vsel %vm1149, %v1064, %v1266
        %1268 = vrot.lane.b32.xlu0 %v1267, 56
        %v1269 = vpop.permute.xlu0 %1268
        %v1271 = vsel %vm1067, %v1150, %v1167
        %vm1272 = vcmask 130048
        %v1273 = vsel %vm1272, %v1271, %v1184
        %vm1274 = vcmask 195584
        %v1275 = vsel %vm1274, %v1273, %v1201
        %vm1276 = vcmask 261120
        %v1277 = vsel %vm1276, %v1275, %v1218
        %vm1278 = vcmask 326656
        %v1279 = vsel %vm1278, %v1277, %v1235
        %vm1280 = vcmask 392192
        %v1281 = vsel %vm1280, %v1279, %v1252
        %vm1282 = vcmask 457728
        %v1283 = vsel %vm1282, %v1281, %v1269
        %vm1284 = vcmask 523264
        %1285 = vst.msk [vmem:[%s192] sm:$0xff] %vm1284, %v1283
        %s1286 = sand.u32 %s79, 1
        %s1287 = scalar_lea.sflag [#allocation6], %s1286
        %s1288 = sand.u32 %s79, 1
        %s1289 = smul.addr %s1288, 8
        %s1290 = scalar_lea.vmem [#allocation7], %s1289
        %s1291 = sand.u32 %s105, 1
        %s1292 = scalar_lea.sflag [#allocation9], %s1291
        %s1293 = sand.u32 %s105, 1
        %s1294 = smul.addr %s1293, 2
        %s1295 = scalar_lea.vmem [#allocation8], %s1294
        // Predicated region
        $region33: #{tpu_custom_call.1} parent=27 // pred_check
          %p1296 = pneg %p89
        $region34: #{tpu_custom_call.1} parent=27 // pred_check_branch
          %1298 = sbr.rel (%p1296) target = $region36
        $region35: #{tpu_custom_call.1} parent=27 // pred_region
          %s1300 = ssub.s32 128, 128
          %1301 = vsyncadd %s1287, %s1300
          %s1302 = smul.addr %s24, 128
          %s1303 = scalar_lea.hbm %s2, %s1302
          %s1305 = sshll.u32 %s1290, 4
          %s1306 = int_to_ptr.vmem [resolvable:$true] %s1305
          %1308 = dma.vmem_to_hbm [thread:$0]  %s1306, 128, %s1303, %s1287
        $region36: #{tpu_custom_call.1} parent=27 // pred_fallthru
          _
        // Predicated region
        $region37: #{tpu_custom_call.1} parent=27 // pred_check
          %p1309 = pneg %p115
        $region38: #{tpu_custom_call.1} parent=27 // pred_check_branch
          %1311 = sbr.rel (%p1309) target = $region40
        $region39: #{tpu_custom_call.1} parent=27 // pred_region
          %s1313 = ssub.s32 32, 32
          %1314 = vsyncadd %s1292, %s1313
          %s1315 = smul.addr %s24, 32
          %s1316 = scalar_lea.hbm %s3, %s1315
          %s1318 = sshll.u32 %s1295, 4
          %s1319 = int_to_ptr.vmem [resolvable:$true] %s1318
          %1321 = dma.vmem_to_hbm [thread:$0]  %s1319, 32, %s1316, %s1292
        $region40: #{tpu_custom_call.1} parent=27 // pred_fallthru
          _
      $region28: #{tpu_custom_call.1} parent=5 // pred_fallthru
        _
      %p1322 = scmp.le.s32.totalorder 2, %s19
      // Predicated region
      $region41: #{tpu_custom_call.1} parent=5 // pred_check
        %p1323 = pneg %p1322
      $region42: #{tpu_custom_call.1} parent=5 // pred_check_branch
        %1325 = sbr.rel (%p1323) target = $region44
      $region43: #{tpu_custom_call.1} parent=5 // pred_region
        %s1326 = ssub.s32 %s19, 2
        // Predicated region
        $region45: #{tpu_custom_call.1} parent=43 // pred_check
          %p1327 = pneg %p95
        $region46: #{tpu_custom_call.1} parent=43 // pred_check_branch
          %1329 = sbr.rel (%p1327) target = $region48
        $region47: #{tpu_custom_call.1} parent=43 // pred_region
          %s1330 = sand.u32 %s80, 1
          %s1331 = scalar_lea.sflag [#allocation6], %s1330
          %s1332 = sand.u32 %s80, 1
          %s1333 = smul.addr %s1332, 8
          %s1334 = scalar_lea.vmem [#allocation7], %s1333
          %1335 = dma.done %s1331, 128
        $region48: #{tpu_custom_call.1} parent=43 // pred_fallthru
          _
        // Predicated region
        $region49: #{tpu_custom_call.1} parent=43 // pred_check
          %p1336 = pneg %p121
        $region50: #{tpu_custom_call.1} parent=43 // pred_check_branch
          %1338 = sbr.rel (%p1336) target = $region52
        $region51: #{tpu_custom_call.1} parent=43 // pred_region
          %s1339 = sand.u32 %s106, 1
          %s1340 = scalar_lea.sflag [#allocation9], %s1339
          %s1341 = sand.u32 %s106, 1
          %s1342 = smul.addr %s1341, 2
          %s1343 = scalar_lea.vmem [#allocation8], %s1342
          %1344 = dma.done %s1340, 32
        $region52: #{tpu_custom_call.1} parent=43 // pred_fallthru
          _
      $region44: #{tpu_custom_call.1} parent=5 // pred_fallthru
        _
    $region6: #{tpu_custom_call.1} parent=1 // loop_footer
      %s23 = sadd.s32 1, %s19
    $region7: #{tpu_custom_call.1} parent=1 // loop_footer_branch
      %18 = sbr.rel target = $region3
    $region8: #{tpu_custom_call.1} parent=1 // loop_exit
      _
    %1345 = vsyncpa [#allocation5], 1
    %s1346 = scalar_lea.sflag [#allocation5], 1
    %1347 = vsyncpa %s1346, 1
    %1348 = vsyncpa [#allocation6], 1
    %s1349 = scalar_lea.sflag [#allocation6], 1
    %1350 = vsyncpa %s1349, 1
    %1351 = vsyncpa [#allocation9], 1
    %s1352 = scalar_lea.sflag [#allocation9], 1
    %1353 = vsyncpa %s1352, 1

</llo_original>
